<compile_context>
chip_gen: v7x
topology: tpu7x:2x2x1
jax: 0.10.0
libtpu: 0.0.40
codegen_flags: <defaults>
</compile_context>

<pallas_src>
import functools
import math

import jax
import jax.numpy as jnp
import numpy as np
from jax.experimental import pallas as pl
from jax.experimental.pallas import tpu as pltpu

NUM_UNITS = 32          # self.num_units
NUM_TEST = 32 // 2      # self.num_test
LN_EPS = 1e-5           # torch.nn.LayerNorm default eps

# Rows of the packed bias / LayerNorm table (each row is 32 lanes, zero-padded).
ROW_B_SELF1 = 0
ROW_B_SELF2 = 1
ROW_B_FOOD1 = 2
ROW_B_FOOD2 = 3
ROW_G_FOOD = 4
ROW_BT_FOOD = 5
ROW_B_OTH1 = 6
ROW_B_OTH2 = 7
ROW_G_OTH = 8
ROW_BT_OTH = 9
ROW_B_M1 = 10
ROW_B_M2 = 11
ROW_B_HEAD = 12
N_BIAS_ROWS = 13


# --------------------------- kernel-side helpers ---------------------------

def _relu(x):
    return jnp.maximum(x, 0.0)


def _leaky_relu(x):
    # torch.nn.functional.leaky_relu default negative_slope = 0.01
    return jnp.where(x >= 0.0, x, 0.01 * x)


def _layer_norm(x, g, b):
    mu = jnp.mean(x, axis=-1, keepdims=True)
    var = jnp.mean((x - mu) ** 2, axis=-1, keepdims=True)
    return (x - mu) * jax.lax.rsqrt(var + LN_EPS) * g + b


# --------------------------------- kernel ----------------------------------

def actor_att_kernel(x_ref, w1p_ref, w2p_ref, wm1_ref, wm2_ref, wh_ref, b_ref,
                     out_ref, *, n_food, n_other):
    tb = x_ref.shape[0]
    inv_scale = 1.0 / math.sqrt(NUM_TEST)

    def bias_row(r, n):
        return b_ref[r:r + 1, 0:n]                                       # (1, n)

    def layer1(xy, k, bias_r):
        # Linear(2, 32) via two VPU broadcast-FMAs (K=2 -> skip the MXU).
        w0 = w1p_ref[2 * k:2 * k + 1, :]                                 # (1, 32)
        w1 = w1p_ref[2 * k + 1:2 * k + 2, :]                             # (1, 32)
        return _relu(xy[:, 0:1] * w0 + xy[:, 1:2] * w1 + bias_row(bias_r, NUM_UNITS))

    def layer2(h, k, bias_r):
        w2 = w2p_ref[NUM_UNITS * k:NUM_UNITS * (k + 1), :]               # (32, 16)
        return _relu(jnp.dot(h, w2, preferred_element_type=jnp.float32)
                     + bias_row(bias_r, NUM_TEST))

    x = x_ref[...]                                                       # (tb, D)

    # ----- self branch -----
    s1 = layer1(x[:, 0:2], 0, ROW_B_SELF1)                               # (tb, 32)
    self_out = layer2(s1, 0, ROW_B_SELF2)                                # (tb, 16)

    # ----- entity (food / other) attention branch, fully folded -----
    def branch(col0, n_ent, k, rows):
        # Stack entity coords along sublanes -> one FMA + one matmul per branch.
        ents = jnp.concatenate(
            [x[:, col0 + 2 * j: col0 + 2 * j + 2] for j in range(n_ent)], axis=0
        )                                                                # (n_ent*tb, 2)
        e1 = layer1(ents, k, rows[0])                                    # (n_ent*tb, 32)
        e2 = layer2(e1, k, rows[1])                                      # (n_ent*tb, 16)
        e2_parts = [e2[j * tb:(j + 1) * tb, :] for j in range(n_ent)]    # views

        # dot-product attention over entities (tiny cross-entity unroll, VPU/XLU only)
        logits = [jnp.sum(self_out * e, axis=-1, keepdims=True) * inv_scale
                  for e in e2_parts]                                     # each (tb, 1)
        m = logits[0]
        for l in logits[1:]:
            m = jnp.maximum(m, l)
        ps = [jnp.exp(l - m) for l in logits]
        denom = ps[0]
        for p in ps[1:]:
            denom = denom + p
        pooled = ps[0] * e2_parts[0]
        for p, e in zip(ps[1:], e2_parts[1:]):
            pooled = pooled + p * e
        pooled = pooled * pl.reciprocal(denom, approx=True)              # (tb, 16)

        g = bias_row(rows[2], NUM_TEST)
        bt = bias_row(rows[3], NUM_TEST)
        return _relu(_layer_norm(pooled, g, bt))

    food_out = branch(2, n_food, 1,
                      (ROW_B_FOOD1, ROW_B_FOOD2, ROW_G_FOOD, ROW_BT_FOOD))
    other_out = branch(2 + 2 * n_food, n_other, 2,
                       (ROW_B_OTH1, ROW_B_OTH2, ROW_G_OTH, ROW_BT_OTH))

    # ----- merge head: split-weight accumulation (no 48-lane concat) -----
    h = (jnp.dot(self_out, wm1_ref[0:NUM_TEST, :], preferred_element_type=jnp.float32)
         + jnp.dot(food_out, wm1_ref[NUM_TEST:2 * NUM_TEST, :], preferred_element_type=jnp.float32)
         + jnp.dot(other_out, wm1_ref[2 * NUM_TEST:3 * NUM_TEST, :], preferred_element_type=jnp.float32)
         + bias_row(ROW_B_M1, NUM_UNITS))
    h = _leaky_relu(h)
    h = _leaky_relu(jnp.dot(h, wm2_ref[...], preferred_element_type=jnp.float32)
                    + bias_row(ROW_B_M2, NUM_UNITS))

    # fused (32, 2) head: lane 0 -> tanh, lane 1 -> sigmoid
    z = jnp.dot(h, wh_ref[...], preferred_element_type=jnp.float32) + bias_row(ROW_B_HEAD, 2)
    lane = jax.lax.broadcasted_iota(jnp.int32, z.shape, 1)
    out_ref[...] = jnp.where(lane == 0, jnp.tanh(z), jax.nn.sigmoid(z))


# ------------------------------ JAX wrapper --------------------------------

def init_params(key, n_agents):
    """Deterministic parameter init (PyTorch nn.Linear-style uniform)."""
    del n_agents  # layer shapes do not depend on n_agents

    def linear(k, fan_in, fan_out):
        k1, k2 = jax.random.split(k)
        bound = 1.0 / math.sqrt(fan_in)
        w = jax.random.uniform(k1, (fan_in, fan_out), jnp.float32, -bound, bound)
        b = jax.random.uniform(k2, (1, fan_out), jnp.float32, -bound, bound)
        return w, b

    keys = jax.random.split(key, 10)
    ln = lambda: (jnp.ones((1, NUM_TEST), jnp.float32),
                  jnp.zeros((1, NUM_TEST), jnp.float32))
    return {
        "self1": linear(keys[0], 2, NUM_UNITS),
        "self2": linear(keys[1], NUM_UNITS, NUM_TEST),
        "food1": linear(keys[2], 2, NUM_UNITS),
        "food2": linear(keys[3], NUM_UNITS, NUM_TEST),
        "food_norm": ln(),
        "other1": linear(keys[4], 2, NUM_UNITS),
        "other2": linear(keys[5], NUM_UNITS, NUM_TEST),
        "other_norm": ln(),
        "merge1": linear(keys[6], NUM_TEST * 3, NUM_UNITS),
        "merge2": linear(keys[7], NUM_UNITS, NUM_UNITS),
        "merge3": linear(keys[8], NUM_UNITS, 1),
        "merge3_1": linear(keys[9], NUM_UNITS, 1),
    }


def _pack_params(params):
    """Pack ~27 tiny tensors into 6 arrays (fewer DMAs, static slices in-kernel)."""
    # first-layer weights, row-stacked: rows 2k..2k+1 = branch k (self, food, other)
    w1p = jnp.concatenate(
        [params["self1"][0], params["food1"][0], params["other1"][0]], axis=0)   # (6, 32)
    # second-layer weights, row-stacked: rows 32k..32k+31 = branch k
    w2p = jnp.concatenate(
        [params["self2"][0], params["food2"][0], params["other2"][0]], axis=0)   # (96, 16)
    wm1 = params["merge1"][0]                                                    # (48, 32)
    wm2 = params["merge2"][0]                                                    # (32, 32)
    wh = jnp.concatenate([params["merge3"][0], params["merge3_1"][0]], axis=1)   # (32, 2)

    def row(v):
        v = v.reshape(1, -1)
        return jnp.pad(v, ((0, 0), (0, NUM_UNITS - v.shape[1])))

    bias = jnp.concatenate([
        row(params["self1"][1]), row(params["self2"][1]),
        row(params["food1"][1]), row(params["food2"][1]),
        row(params["food_norm"][0]), row(params["food_norm"][1]),
        row(params["other1"][1]), row(params["other2"][1]),
        row(params["other_norm"][0]), row(params["other_norm"][1]),
        row(params["merge1"][1]), row(params["merge2"][1]),
        row(jnp.concatenate([params["merge3"][1], params["merge3_1"][1]], axis=1)),
    ], axis=0)                                                                   # (13, 32)
    return w1p, w2p, wm1, wm2, wh, bias


def _round_up(v, m):
    return (v + m - 1) // m * m


def actor_att_forward(x, params, n_agents, tile_b=128):
    B, D = x.shape
    n_food = n_agents
    n_other = n_agents - 1
    assert D == 2 + 2 * n_food + 2 * n_other

    # batch tiling: TILE_B multiple of 8 (f32 sublane), pad B up to a tile multiple
    tile_b = _round_up(max(8, min(tile_b, _round_up(B, 8))), 8)
    Bp = _round_up(B, tile_b)
    xp = x if Bp == B else jnp.pad(x, ((0, Bp - B), (0, 0)))

    w1p, w2p, wm1, wm2, wh, bias = _pack_params(params)
    param_inputs = (w1p, w2p, wm1, wm2, wh, bias)

    kernel = functools.partial(actor_att_kernel, n_food=n_food, n_other=n_other)
    param_spec = lambda p: pl.BlockSpec(p.shape, lambda i: (0, 0))  # VMEM-resident

    out = pl.pallas_call(
        kernel,
        out_shape=jax.ShapeDtypeStruct((Bp, 2), jnp.float32),
        grid=(Bp // tile_b,),
        in_specs=[pl.BlockSpec((tile_b, D), lambda i: (i, 0))]
                 + [param_spec(p) for p in param_inputs],
        out_specs=pl.BlockSpec((tile_b, 2), lambda i: (i, 0)),
        compiler_params=pltpu.CompilerParams(dimension_semantics=("parallel",)),
    )(xp, *param_inputs)
    return out[:B]


# ----------------------- pure-JAX reference (for check) --------------------

def actor_att_reference(x, params, n_agents):
    B = x.shape[0]
    n_food = n_agents
    n_other = n_agents - 1
    relu = jax.nn.relu

    def lin(h, p):
        return h @ p[0] + p[1]

    self_out = relu(lin(relu(lin(x[:, :2], params["self1"])), params["self2"]))

    def branch(ents, p1, p2, pn):
        e = relu(jnp.einsum("jbd,dk->jbk", ents, p1[0]) + p1[1])
        e = relu(jnp.einsum("jbk,km->jbm", e, p2[0]) + p2[1])        # (J, B, 16)
        logits = jnp.einsum("bk,jbk->bj", self_out, e) / math.sqrt(NUM_TEST)
        attn = jax.nn.softmax(logits, axis=-1)
        pooled = jnp.einsum("bj,jbk->bk", attn, e)
        mu = pooled.mean(-1, keepdims=True)
        var = ((pooled - mu) ** 2).mean(-1, keepdims=True)
        return relu((pooled - mu) / jnp.sqrt(var + LN_EPS) * pn[0] + pn[1])

    food = x[:, 2:2 + n_food * 2].reshape(B, n_food, 2).transpose(1, 0, 2)
    other = (x[:, 2 + n_food * 2: 2 + n_food * 2 + n_other * 2]
             .reshape(B, n_other, 2).transpose(1, 0, 2))

    food_out = branch(food, params["food1"], params["food2"], params["food_norm"])
    other_out = branch(other, params["other1"], params["other2"], params["other_norm"])

    merged = jnp.concatenate([self_out, food_out, other_out], axis=-1)
    leaky = lambda v: jnp.where(v >= 0.0, v, 0.01 * v)
    h = leaky(lin(merged, params["merge1"]))
    h = leaky(lin(h, params["merge2"]))
    out1 = jnp.tanh(lin(h, params["merge3"]))
    out2 = jax.nn.sigmoid(lin(h, params["merge3_1"]))
    return jnp.concatenate([out1, out2], axis=-1)


# ---------------------------------- main ------------------------------------

if __name__ == "__main__":
    n_agents = 4                                   # args.n_agents
    B = 16
    D = 2 + n_agents * 2 + (n_agents - 1) * 2      # 16

    key = jax.random.PRNGKey(0)
    kx, kp = jax.random.split(key)
    x = jax.random.normal(kx, (B, D), dtype=jnp.float32)
    params = init_params(kp, n_agents)

    # tile_b=8 -> 2 grid steps, exercising the batch pipeline / parallel axis
    out = actor_att_forward(x, params, n_agents, tile_b=8)
    out = jax.block_until_ready(out)

    ref = actor_att_reference(x, params, n_agents)
    np.testing.assert_allclose(np.asarray(out), np.asarray(ref), rtol=2e-3, atol=2e-3)

    print("KERNEL_OK")
</pallas_src>

<mosaic_0001>
module attributes {stable_mosaic.version = 11 : i64} {
  func.func @actor_att_kernel(%arg0: i32, %arg1: memref<8x16xf32, #tpu.memory_space<vmem>>, %arg2: memref<6x32xf32, #tpu.memory_space<vmem>>, %arg3: memref<96x16xf32, #tpu.memory_space<vmem>>, %arg4: memref<48x32xf32, #tpu.memory_space<vmem>>, %arg5: memref<32x32xf32, #tpu.memory_space<vmem>>, %arg6: memref<32x2xf32, #tpu.memory_space<vmem>>, %arg7: memref<13x32xf32, #tpu.memory_space<vmem>>, %arg8: memref<8x2xf32, #tpu.memory_space<vmem>>) attributes {dimension_semantics = [#tpu.dimension_semantics<parallel>], iteration_bounds = array<i64: 2>, scalar_prefetch = 0 : i64, scratch_operands = 0 : i64, tpu.core_type = #tpu.core_type<tc>, window_params = [{transform_indices = @transform_0, window_bounds = array<i64: 8, 16>}, {pipeline_mode = #tpu.pipeline_mode<synchronous>, transform_indices = @transform_1, window_bounds = array<i64: 6, 32>}, {pipeline_mode = #tpu.pipeline_mode<synchronous>, transform_indices = @transform_2, window_bounds = array<i64: 96, 16>}, {pipeline_mode = #tpu.pipeline_mode<synchronous>, transform_indices = @transform_3, window_bounds = array<i64: 48, 32>}, {pipeline_mode = #tpu.pipeline_mode<synchronous>, transform_indices = @transform_4, window_bounds = array<i64: 32, 32>}, {pipeline_mode = #tpu.pipeline_mode<synchronous>, transform_indices = @transform_5, window_bounds = array<i64: 32, 2>}, {pipeline_mode = #tpu.pipeline_mode<synchronous>, transform_indices = @transform_6, window_bounds = array<i64: 13, 32>}, {transform_indices = @transform_7, window_bounds = array<i64: 8, 2>}]} {
    %c0 = arith.constant 0 : index
    %c0_0 = arith.constant 0 : index
    %0 = vector.load %arg1[%c0, %c0_0] : memref<8x16xf32, #tpu.memory_space<vmem>>, vector<8x16xf32>
    %1 = vector.extract_strided_slice %0 {offsets = [0, 0], sizes = [8, 2], strides = [1, 1]} : vector<8x16xf32> to vector<8x2xf32>
    %c0_1 = arith.constant 0 : index
    %c0_2 = arith.constant 0 : index
    %2 = vector.load %arg2[%c0_1, %c0_2] : memref<6x32xf32, #tpu.memory_space<vmem>>, vector<1x32xf32>
    %c1 = arith.constant 1 : index
    %c0_3 = arith.constant 0 : index
    %3 = vector.load %arg2[%c1, %c0_3] : memref<6x32xf32, #tpu.memory_space<vmem>>, vector<1x32xf32>
    %4 = vector.extract_strided_slice %1 {offsets = [0, 0], sizes = [8, 1], strides = [1, 1]} : vector<8x2xf32> to vector<8x1xf32>
    %5 = vector.broadcast %4 : vector<8x1xf32> to vector<8x32xf32>
    %6 = vector.broadcast %2 : vector<1x32xf32> to vector<8x32xf32>
    %7 = arith.mulf %5, %6 : vector<8x32xf32>
    %8 = vector.extract_strided_slice %1 {offsets = [0, 1], sizes = [8, 1], strides = [1, 1]} : vector<8x2xf32> to vector<8x1xf32>
    %9 = vector.broadcast %8 : vector<8x1xf32> to vector<8x32xf32>
    %10 = vector.broadcast %3 : vector<1x32xf32> to vector<8x32xf32>
    %11 = arith.mulf %9, %10 : vector<8x32xf32>
    %12 = arith.addf %7, %11 : vector<8x32xf32>
    %c0_4 = arith.constant 0 : index
    %c0_5 = arith.constant 0 : index
    %13 = vector.load %arg7[%c0_4, %c0_5] : memref<13x32xf32, #tpu.memory_space<vmem>>, vector<1x32xf32>
    %14 = vector.broadcast %13 : vector<1x32xf32> to vector<8x32xf32>
    %15 = arith.addf %12, %14 : vector<8x32xf32>
    %cst = arith.constant 0.000000e+00 : f32
    %16 = vector.broadcast %cst : f32 to vector<8x32xf32>
    %17 = arith.maximumf %15, %16 : vector<8x32xf32>
    %c0_6 = arith.constant 0 : index
    %c0_7 = arith.constant 0 : index
    %18 = vector.load %arg3[%c0_6, %c0_7] : memref<96x16xf32, #tpu.memory_space<vmem>>, vector<32x16xf32>
    %cst_8 = arith.constant dense<0.000000e+00> : vector<8x16xf32>
    %19 = tpu.matmul %17, %18, %cst_8 {dimension_numbers = #tpu.dot_dimension_numbers<[1], [0], [0], [1], [0, 0, 1, 1], [], []>} : vector<8x32xf32>, vector<32x16xf32>, vector<8x16xf32> -> vector<8x16xf32>
    %c1_9 = arith.constant 1 : index
    %c0_10 = arith.constant 0 : index
    %20 = vector.load %arg7[%c1_9, %c0_10] : memref<13x32xf32, #tpu.memory_space<vmem>>, vector<1x16xf32>
    %21 = vector.broadcast %20 : vector<1x16xf32> to vector<8x16xf32>
    %22 = arith.addf %19, %21 : vector<8x16xf32>
    %cst_11 = arith.constant 0.000000e+00 : f32
    %23 = vector.broadcast %cst_11 : f32 to vector<8x16xf32>
    %24 = arith.maximumf %22, %23 : vector<8x16xf32>
    %25 = vector.extract_strided_slice %0 {offsets = [0, 2], sizes = [8, 2], strides = [1, 1]} : vector<8x16xf32> to vector<8x2xf32>
    %26 = vector.extract_strided_slice %0 {offsets = [0, 4], sizes = [8, 2], strides = [1, 1]} : vector<8x16xf32> to vector<8x2xf32>
    %27 = vector.extract_strided_slice %0 {offsets = [0, 6], sizes = [8, 2], strides = [1, 1]} : vector<8x16xf32> to vector<8x2xf32>
    %28 = vector.extract_strided_slice %0 {offsets = [0, 8], sizes = [8, 2], strides = [1, 1]} : vector<8x16xf32> to vector<8x2xf32>
    %29 = tpu.concatenate %25, %26, %27, %28 in 0 : vector<8x2xf32>, vector<8x2xf32>, vector<8x2xf32>, vector<8x2xf32> -> vector<32x2xf32>
    %c2 = arith.constant 2 : index
    %c0_12 = arith.constant 0 : index
    %30 = vector.load %arg2[%c2, %c0_12] : memref<6x32xf32, #tpu.memory_space<vmem>>, vector<1x32xf32>
    %c3 = arith.constant 3 : index
    %c0_13 = arith.constant 0 : index
    %31 = vector.load %arg2[%c3, %c0_13] : memref<6x32xf32, #tpu.memory_space<vmem>>, vector<1x32xf32>
    %32 = vector.extract_strided_slice %29 {offsets = [0, 0], sizes = [32, 1], strides = [1, 1]} : vector<32x2xf32> to vector<32x1xf32>
    %33 = vector.broadcast %32 : vector<32x1xf32> to vector<32x32xf32>
    %34 = vector.broadcast %30 : vector<1x32xf32> to vector<32x32xf32>
    %35 = arith.mulf %33, %34 : vector<32x32xf32>
    %36 = vector.extract_strided_slice %29 {offsets = [0, 1], sizes = [32, 1], strides = [1, 1]} : vector<32x2xf32> to vector<32x1xf32>
    %37 = vector.broadcast %36 : vector<32x1xf32> to vector<32x32xf32>
    %38 = vector.broadcast %31 : vector<1x32xf32> to vector<32x32xf32>
    %39 = arith.mulf %37, %38 : vector<32x32xf32>
    %40 = arith.addf %35, %39 : vector<32x32xf32>
    %c2_14 = arith.constant 2 : index
    %c0_15 = arith.constant 0 : index
    %41 = vector.load %arg7[%c2_14, %c0_15] : memref<13x32xf32, #tpu.memory_space<vmem>>, vector<1x32xf32>
    %42 = vector.broadcast %41 : vector<1x32xf32> to vector<32x32xf32>
    %43 = arith.addf %40, %42 : vector<32x32xf32>
    %cst_16 = arith.constant 0.000000e+00 : f32
    %44 = vector.broadcast %cst_16 : f32 to vector<32x32xf32>
    %45 = arith.maximumf %43, %44 : vector<32x32xf32>
    %c32 = arith.constant 32 : index
    %c0_17 = arith.constant 0 : index
    %46 = vector.load %arg3[%c32, %c0_17] : memref<96x16xf32, #tpu.memory_space<vmem>>, vector<32x16xf32>
    %cst_18 = arith.constant dense<0.000000e+00> : vector<32x16xf32>
    %47 = tpu.matmul %45, %46, %cst_18 {dimension_numbers = #tpu.dot_dimension_numbers<[1], [0], [0], [1], [0, 0, 1, 1], [], []>} : vector<32x32xf32>, vector<32x16xf32>, vector<32x16xf32> -> vector<32x16xf32>
    %c3_19 = arith.constant 3 : index
    %c0_20 = arith.constant 0 : index
    %48 = vector.load %arg7[%c3_19, %c0_20] : memref<13x32xf32, #tpu.memory_space<vmem>>, vector<1x16xf32>
    %49 = vector.broadcast %48 : vector<1x16xf32> to vector<32x16xf32>
    %50 = arith.addf %47, %49 : vector<32x16xf32>
    %cst_21 = arith.constant 0.000000e+00 : f32
    %51 = vector.broadcast %cst_21 : f32 to vector<32x16xf32>
    %52 = arith.maximumf %50, %51 : vector<32x16xf32>
    %53 = vector.extract_strided_slice %52 {offsets = [0, 0], sizes = [8, 16], strides = [1, 1]} : vector<32x16xf32> to vector<8x16xf32>
    %54 = vector.extract_strided_slice %52 {offsets = [8, 0], sizes = [8, 16], strides = [1, 1]} : vector<32x16xf32> to vector<8x16xf32>
    %55 = vector.extract_strided_slice %52 {offsets = [16, 0], sizes = [8, 16], strides = [1, 1]} : vector<32x16xf32> to vector<8x16xf32>
    %56 = vector.extract_strided_slice %52 {offsets = [24, 0], sizes = [8, 16], strides = [1, 1]} : vector<32x16xf32> to vector<8x16xf32>
    %57 = arith.mulf %24, %53 : vector<8x16xf32>
    %cst_22 = arith.constant dense<0.000000e+00> : vector<8xf32>
    %58 = vector.multi_reduction <add>, %57, %cst_22 [1] : vector<8x16xf32> to vector<8xf32>
    %59 = vector.shape_cast %58 : vector<8xf32> to vector<8x1xf32>
    %cst_23 = arith.constant 2.500000e-01 : f32
    %60 = vector.broadcast %cst_23 : f32 to vector<8x1xf32>
    %61 = arith.mulf %59, %60 : vector<8x1xf32>
    %62 = arith.mulf %24, %54 : vector<8x16xf32>
    %cst_24 = arith.constant dense<0.000000e+00> : vector<8xf32>
    %63 = vector.multi_reduction <add>, %62, %cst_24 [1] : vector<8x16xf32> to vector<8xf32>
    %64 = vector.shape_cast %63 : vector<8xf32> to vector<8x1xf32>
    %cst_25 = arith.constant 2.500000e-01 : f32
    %65 = vector.broadcast %cst_25 : f32 to vector<8x1xf32>
    %66 = arith.mulf %64, %65 : vector<8x1xf32>
    %67 = arith.mulf %24, %55 : vector<8x16xf32>
    %cst_26 = arith.constant dense<0.000000e+00> : vector<8xf32>
    %68 = vector.multi_reduction <add>, %67, %cst_26 [1] : vector<8x16xf32> to vector<8xf32>
    %69 = vector.shape_cast %68 : vector<8xf32> to vector<8x1xf32>
    %cst_27 = arith.constant 2.500000e-01 : f32
    %70 = vector.broadcast %cst_27 : f32 to vector<8x1xf32>
    %71 = arith.mulf %69, %70 : vector<8x1xf32>
    %72 = arith.mulf %24, %56 : vector<8x16xf32>
    %cst_28 = arith.constant dense<0.000000e+00> : vector<8xf32>
    %73 = vector.multi_reduction <add>, %72, %cst_28 [1] : vector<8x16xf32> to vector<8xf32>
    %74 = vector.shape_cast %73 : vector<8xf32> to vector<8x1xf32>
    %cst_29 = arith.constant 2.500000e-01 : f32
    %75 = vector.broadcast %cst_29 : f32 to vector<8x1xf32>
    %76 = arith.mulf %74, %75 : vector<8x1xf32>
    %77 = arith.maximumf %61, %66 : vector<8x1xf32>
    %78 = arith.maximumf %77, %71 : vector<8x1xf32>
    %79 = arith.maximumf %78, %76 : vector<8x1xf32>
    %80 = arith.subf %61, %79 : vector<8x1xf32>
    %81 = math.exp %80 : vector<8x1xf32>
    %82 = arith.subf %66, %79 : vector<8x1xf32>
    %83 = math.exp %82 : vector<8x1xf32>
    %84 = arith.subf %71, %79 : vector<8x1xf32>
    %85 = math.exp %84 : vector<8x1xf32>
    %86 = arith.subf %76, %79 : vector<8x1xf32>
    %87 = math.exp %86 : vector<8x1xf32>
    %88 = arith.addf %81, %83 : vector<8x1xf32>
    %89 = arith.addf %88, %85 : vector<8x1xf32>
    %90 = arith.addf %89, %87 : vector<8x1xf32>
    %91 = vector.broadcast %81 : vector<8x1xf32> to vector<8x16xf32>
    %92 = arith.mulf %91, %53 : vector<8x16xf32>
    %93 = vector.broadcast %83 : vector<8x1xf32> to vector<8x16xf32>
    %94 = arith.mulf %93, %54 : vector<8x16xf32>
    %95 = arith.addf %92, %94 : vector<8x16xf32>
    %96 = vector.broadcast %85 : vector<8x1xf32> to vector<8x16xf32>
    %97 = arith.mulf %96, %55 : vector<8x16xf32>
    %98 = arith.addf %95, %97 : vector<8x16xf32>
    %99 = vector.broadcast %87 : vector<8x1xf32> to vector<8x16xf32>
    %100 = arith.mulf %99, %56 : vector<8x16xf32>
    %101 = arith.addf %98, %100 : vector<8x16xf32>
    %102 = tpu.reciprocal %90 {approx = true} : vector<8x1xf32> -> vector<8x1xf32>
    %103 = vector.broadcast %102 : vector<8x1xf32> to vector<8x16xf32>
    %104 = arith.mulf %101, %103 : vector<8x16xf32>
    %c4 = arith.constant 4 : index
    %c0_30 = arith.constant 0 : index
    %105 = vector.load %arg7[%c4, %c0_30] : memref<13x32xf32, #tpu.memory_space<vmem>>, vector<1x16xf32>
    %c5 = arith.constant 5 : index
    %c0_31 = arith.constant 0 : index
    %106 = vector.load %arg7[%c5, %c0_31] : memref<13x32xf32, #tpu.memory_space<vmem>>, vector<1x16xf32>
    %cst_32 = arith.constant dense<0.000000e+00> : vector<8xf32>
    %107 = vector.multi_reduction <add>, %104, %cst_32 [1] : vector<8x16xf32> to vector<8xf32>
    %108 = vector.shape_cast %107 : vector<8xf32> to vector<8x1xf32>
    %cst_33 = arith.constant 1.600000e+01 : f32
    %109 = vector.broadcast %cst_33 : f32 to vector<8x1xf32>
    %110 = arith.divf %108, %109 : vector<8x1xf32>
    %111 = vector.broadcast %110 : vector<8x1xf32> to vector<8x16xf32>
    %112 = arith.subf %104, %111 : vector<8x16xf32>
    %113 = arith.mulf %112, %112 : vector<8x16xf32>
    %cst_34 = arith.constant dense<0.000000e+00> : vector<8xf32>
    %114 = vector.multi_reduction <add>, %113, %cst_34 [1] : vector<8x16xf32> to vector<8xf32>
    %115 = vector.shape_cast %114 : vector<8xf32> to vector<8x1xf32>
    %cst_35 = arith.constant 1.600000e+01 : f32
    %116 = vector.broadcast %cst_35 : f32 to vector<8x1xf32>
    %117 = arith.divf %115, %116 : vector<8x1xf32>
    %118 = vector.broadcast %110 : vector<8x1xf32> to vector<8x16xf32>
    %119 = arith.subf %104, %118 : vector<8x16xf32>
    %cst_36 = arith.constant 9.99999974E-6 : f32
    %120 = vector.broadcast %cst_36 : f32 to vector<8x1xf32>
    %121 = arith.addf %117, %120 : vector<8x1xf32>
    %122 = math.rsqrt %121 : vector<8x1xf32>
    %123 = vector.broadcast %122 : vector<8x1xf32> to vector<8x16xf32>
    %124 = arith.mulf %119, %123 : vector<8x16xf32>
    %125 = vector.broadcast %105 : vector<1x16xf32> to vector<8x16xf32>
    %126 = arith.mulf %124, %125 : vector<8x16xf32>
    %127 = vector.broadcast %106 : vector<1x16xf32> to vector<8x16xf32>
    %128 = arith.addf %126, %127 : vector<8x16xf32>
    %cst_37 = arith.constant 0.000000e+00 : f32
    %129 = vector.broadcast %cst_37 : f32 to vector<8x16xf32>
    %130 = arith.maximumf %128, %129 : vector<8x16xf32>
    %131 = vector.extract_strided_slice %0 {offsets = [0, 10], sizes = [8, 2], strides = [1, 1]} : vector<8x16xf32> to vector<8x2xf32>
    %132 = vector.extract_strided_slice %0 {offsets = [0, 12], sizes = [8, 2], strides = [1, 1]} : vector<8x16xf32> to vector<8x2xf32>
    %133 = vector.extract_strided_slice %0 {offsets = [0, 14], sizes = [8, 2], strides = [1, 1]} : vector<8x16xf32> to vector<8x2xf32>
    %134 = tpu.concatenate %131, %132, %133 in 0 : vector<8x2xf32>, vector<8x2xf32>, vector<8x2xf32> -> vector<24x2xf32>
    %c4_38 = arith.constant 4 : index
    %c0_39 = arith.constant 0 : index
    %135 = vector.load %arg2[%c4_38, %c0_39] : memref<6x32xf32, #tpu.memory_space<vmem>>, vector<1x32xf32>
    %c5_40 = arith.constant 5 : index
    %c0_41 = arith.constant 0 : index
    %136 = vector.load %arg2[%c5_40, %c0_41] : memref<6x32xf32, #tpu.memory_space<vmem>>, vector<1x32xf32>
    %137 = vector.extract_strided_slice %134 {offsets = [0, 0], sizes = [24, 1], strides = [1, 1]} : vector<24x2xf32> to vector<24x1xf32>
    %138 = vector.broadcast %137 : vector<24x1xf32> to vector<24x32xf32>
    %139 = vector.broadcast %135 : vector<1x32xf32> to vector<24x32xf32>
    %140 = arith.mulf %138, %139 : vector<24x32xf32>
    %141 = vector.extract_strided_slice %134 {offsets = [0, 1], sizes = [24, 1], strides = [1, 1]} : vector<24x2xf32> to vector<24x1xf32>
    %142 = vector.broadcast %141 : vector<24x1xf32> to vector<24x32xf32>
    %143 = vector.broadcast %136 : vector<1x32xf32> to vector<24x32xf32>
    %144 = arith.mulf %142, %143 : vector<24x32xf32>
    %145 = arith.addf %140, %144 : vector<24x32xf32>
    %c6 = arith.constant 6 : index
    %c0_42 = arith.constant 0 : index
    %146 = vector.load %arg7[%c6, %c0_42] : memref<13x32xf32, #tpu.memory_space<vmem>>, vector<1x32xf32>
    %147 = vector.broadcast %146 : vector<1x32xf32> to vector<24x32xf32>
    %148 = arith.addf %145, %147 : vector<24x32xf32>
    %cst_43 = arith.constant 0.000000e+00 : f32
    %149 = vector.broadcast %cst_43 : f32 to vector<24x32xf32>
    %150 = arith.maximumf %148, %149 : vector<24x32xf32>
    %c64 = arith.constant 64 : index
    %c0_44 = arith.constant 0 : index
    %151 = vector.load %arg3[%c64, %c0_44] : memref<96x16xf32, #tpu.memory_space<vmem>>, vector<32x16xf32>
    %cst_45 = arith.constant dense<0.000000e+00> : vector<24x16xf32>
    %152 = tpu.matmul %150, %151, %cst_45 {dimension_numbers = #tpu.dot_dimension_numbers<[1], [0], [0], [1], [0, 0, 1, 1], [], []>} : vector<24x32xf32>, vector<32x16xf32>, vector<24x16xf32> -> vector<24x16xf32>
    %c7 = arith.constant 7 : index
    %c0_46 = arith.constant 0 : index
    %153 = vector.load %arg7[%c7, %c0_46] : memref<13x32xf32, #tpu.memory_space<vmem>>, vector<1x16xf32>
    %154 = vector.broadcast %153 : vector<1x16xf32> to vector<24x16xf32>
    %155 = arith.addf %152, %154 : vector<24x16xf32>
    %cst_47 = arith.constant 0.000000e+00 : f32
    %156 = vector.broadcast %cst_47 : f32 to vector<24x16xf32>
    %157 = arith.maximumf %155, %156 : vector<24x16xf32>
    %158 = vector.extract_strided_slice %157 {offsets = [0, 0], sizes = [8, 16], strides = [1, 1]} : vector<24x16xf32> to vector<8x16xf32>
    %159 = vector.extract_strided_slice %157 {offsets = [8, 0], sizes = [8, 16], strides = [1, 1]} : vector<24x16xf32> to vector<8x16xf32>
    %160 = vector.extract_strided_slice %157 {offsets = [16, 0], sizes = [8, 16], strides = [1, 1]} : vector<24x16xf32> to vector<8x16xf32>
    %161 = arith.mulf %24, %158 : vector<8x16xf32>
    %cst_48 = arith.constant dense<0.000000e+00> : vector<8xf32>
    %162 = vector.multi_reduction <add>, %161, %cst_48 [1] : vector<8x16xf32> to vector<8xf32>
    %163 = vector.shape_cast %162 : vector<8xf32> to vector<8x1xf32>
    %cst_49 = arith.constant 2.500000e-01 : f32
    %164 = vector.broadcast %cst_49 : f32 to vector<8x1xf32>
    %165 = arith.mulf %163, %164 : vector<8x1xf32>
    %166 = arith.mulf %24, %159 : vector<8x16xf32>
    %cst_50 = arith.constant dense<0.000000e+00> : vector<8xf32>
    %167 = vector.multi_reduction <add>, %166, %cst_50 [1] : vector<8x16xf32> to vector<8xf32>
    %168 = vector.shape_cast %167 : vector<8xf32> to vector<8x1xf32>
    %cst_51 = arith.constant 2.500000e-01 : f32
    %169 = vector.broadcast %cst_51 : f32 to vector<8x1xf32>
    %170 = arith.mulf %168, %169 : vector<8x1xf32>
    %171 = arith.mulf %24, %160 : vector<8x16xf32>
    %cst_52 = arith.constant dense<0.000000e+00> : vector<8xf32>
    %172 = vector.multi_reduction <add>, %171, %cst_52 [1] : vector<8x16xf32> to vector<8xf32>
    %173 = vector.shape_cast %172 : vector<8xf32> to vector<8x1xf32>
    %cst_53 = arith.constant 2.500000e-01 : f32
    %174 = vector.broadcast %cst_53 : f32 to vector<8x1xf32>
    %175 = arith.mulf %173, %174 : vector<8x1xf32>
    %176 = arith.maximumf %165, %170 : vector<8x1xf32>
    %177 = arith.maximumf %176, %175 : vector<8x1xf32>
    %178 = arith.subf %165, %177 : vector<8x1xf32>
    %179 = math.exp %178 : vector<8x1xf32>
    %180 = arith.subf %170, %177 : vector<8x1xf32>
    %181 = math.exp %180 : vector<8x1xf32>
    %182 = arith.subf %175, %177 : vector<8x1xf32>
    %183 = math.exp %182 : vector<8x1xf32>
    %184 = arith.addf %179, %181 : vector<8x1xf32>
    %185 = arith.addf %184, %183 : vector<8x1xf32>
    %186 = vector.broadcast %179 : vector<8x1xf32> to vector<8x16xf32>
    %187 = arith.mulf %186, %158 : vector<8x16xf32>
    %188 = vector.broadcast %181 : vector<8x1xf32> to vector<8x16xf32>
    %189 = arith.mulf %188, %159 : vector<8x16xf32>
    %190 = arith.addf %187, %189 : vector<8x16xf32>
    %191 = vector.broadcast %183 : vector<8x1xf32> to vector<8x16xf32>
    %192 = arith.mulf %191, %160 : vector<8x16xf32>
    %193 = arith.addf %190, %192 : vector<8x16xf32>
    %194 = tpu.reciprocal %185 {approx = true} : vector<8x1xf32> -> vector<8x1xf32>
    %195 = vector.broadcast %194 : vector<8x1xf32> to vector<8x16xf32>
    %196 = arith.mulf %193, %195 : vector<8x16xf32>
    %c8 = arith.constant 8 : index
    %c0_54 = arith.constant 0 : index
    %197 = vector.load %arg7[%c8, %c0_54] : memref<13x32xf32, #tpu.memory_space<vmem>>, vector<1x16xf32>
    %c9 = arith.constant 9 : index
    %c0_55 = arith.constant 0 : index
    %198 = vector.load %arg7[%c9, %c0_55] : memref<13x32xf32, #tpu.memory_space<vmem>>, vector<1x16xf32>
    %cst_56 = arith.constant dense<0.000000e+00> : vector<8xf32>
    %199 = vector.multi_reduction <add>, %196, %cst_56 [1] : vector<8x16xf32> to vector<8xf32>
    %200 = vector.shape_cast %199 : vector<8xf32> to vector<8x1xf32>
    %cst_57 = arith.constant 1.600000e+01 : f32
    %201 = vector.broadcast %cst_57 : f32 to vector<8x1xf32>
    %202 = arith.divf %200, %201 : vector<8x1xf32>
    %203 = vector.broadcast %202 : vector<8x1xf32> to vector<8x16xf32>
    %204 = arith.subf %196, %203 : vector<8x16xf32>
    %205 = arith.mulf %204, %204 : vector<8x16xf32>
    %cst_58 = arith.constant dense<0.000000e+00> : vector<8xf32>
    %206 = vector.multi_reduction <add>, %205, %cst_58 [1] : vector<8x16xf32> to vector<8xf32>
    %207 = vector.shape_cast %206 : vector<8xf32> to vector<8x1xf32>
    %cst_59 = arith.constant 1.600000e+01 : f32
    %208 = vector.broadcast %cst_59 : f32 to vector<8x1xf32>
    %209 = arith.divf %207, %208 : vector<8x1xf32>
    %210 = vector.broadcast %202 : vector<8x1xf32> to vector<8x16xf32>
    %211 = arith.subf %196, %210 : vector<8x16xf32>
    %cst_60 = arith.constant 9.99999974E-6 : f32
    %212 = vector.broadcast %cst_60 : f32 to vector<8x1xf32>
    %213 = arith.addf %209, %212 : vector<8x1xf32>
    %214 = math.rsqrt %213 : vector<8x1xf32>
    %215 = vector.broadcast %214 : vector<8x1xf32> to vector<8x16xf32>
    %216 = arith.mulf %211, %215 : vector<8x16xf32>
    %217 = vector.broadcast %197 : vector<1x16xf32> to vector<8x16xf32>
    %218 = arith.mulf %216, %217 : vector<8x16xf32>
    %219 = vector.broadcast %198 : vector<1x16xf32> to vector<8x16xf32>
    %220 = arith.addf %218, %219 : vector<8x16xf32>
    %cst_61 = arith.constant 0.000000e+00 : f32
    %221 = vector.broadcast %cst_61 : f32 to vector<8x16xf32>
    %222 = arith.maximumf %220, %221 : vector<8x16xf32>
    %c0_62 = arith.constant 0 : index
    %c0_63 = arith.constant 0 : index
    %223 = vector.load %arg4[%c0_62, %c0_63] : memref<48x32xf32, #tpu.memory_space<vmem>>, vector<16x32xf32>
    %cst_64 = arith.constant dense<0.000000e+00> : vector<8x32xf32>
    %224 = tpu.matmul %24, %223, %cst_64 {dimension_numbers = #tpu.dot_dimension_numbers<[1], [0], [0], [1], [0, 0, 1, 1], [], []>} : vector<8x16xf32>, vector<16x32xf32>, vector<8x32xf32> -> vector<8x32xf32>
    %c16 = arith.constant 16 : index
    %c0_65 = arith.constant 0 : index
    %225 = vector.load %arg4[%c16, %c0_65] : memref<48x32xf32, #tpu.memory_space<vmem>>, vector<16x32xf32>
    %cst_66 = arith.constant dense<0.000000e+00> : vector<8x32xf32>
    %226 = tpu.matmul %130, %225, %cst_66 {dimension_numbers = #tpu.dot_dimension_numbers<[1], [0], [0], [1], [0, 0, 1, 1], [], []>} : vector<8x16xf32>, vector<16x32xf32>, vector<8x32xf32> -> vector<8x32xf32>
    %227 = arith.addf %224, %226 : vector<8x32xf32>
    %c32_67 = arith.constant 32 : index
    %c0_68 = arith.constant 0 : index
    %228 = vector.load %arg4[%c32_67, %c0_68] : memref<48x32xf32, #tpu.memory_space<vmem>>, vector<16x32xf32>
    %cst_69 = arith.constant dense<0.000000e+00> : vector<8x32xf32>
    %229 = tpu.matmul %222, %228, %cst_69 {dimension_numbers = #tpu.dot_dimension_numbers<[1], [0], [0], [1], [0, 0, 1, 1], [], []>} : vector<8x16xf32>, vector<16x32xf32>, vector<8x32xf32> -> vector<8x32xf32>
    %230 = arith.addf %227, %229 : vector<8x32xf32>
    %c10 = arith.constant 10 : index
    %c0_70 = arith.constant 0 : index
    %231 = vector.load %arg7[%c10, %c0_70] : memref<13x32xf32, #tpu.memory_space<vmem>>, vector<1x32xf32>
    %232 = vector.broadcast %231 : vector<1x32xf32> to vector<8x32xf32>
    %233 = arith.addf %230, %232 : vector<8x32xf32>
    %cst_71 = arith.constant 0.000000e+00 : f32
    %234 = vector.broadcast %cst_71 : f32 to vector<8x32xf32>
    %235 = arith.cmpf oge, %233, %234 : vector<8x32xf32>
    %cst_72 = arith.constant 0.00999999977 : f32
    %236 = vector.broadcast %cst_72 : f32 to vector<8x32xf32>
    %237 = arith.mulf %236, %233 : vector<8x32xf32>
    %238 = arith.select %235, %233, %237 : vector<8x32xi1>, vector<8x32xf32>
    %c0_73 = arith.constant 0 : index
    %c0_74 = arith.constant 0 : index
    %239 = vector.load %arg5[%c0_73, %c0_74] : memref<32x32xf32, #tpu.memory_space<vmem>>, vector<32x32xf32>
    %cst_75 = arith.constant dense<0.000000e+00> : vector<8x32xf32>
    %240 = tpu.matmul %238, %239, %cst_75 {dimension_numbers = #tpu.dot_dimension_numbers<[1], [0], [0], [1], [0, 0, 1, 1], [], []>} : vector<8x32xf32>, vector<32x32xf32>, vector<8x32xf32> -> vector<8x32xf32>
    %c11 = arith.constant 11 : index
    %c0_76 = arith.constant 0 : index
    %241 = vector.load %arg7[%c11, %c0_76] : memref<13x32xf32, #tpu.memory_space<vmem>>, vector<1x32xf32>
    %242 = vector.broadcast %241 : vector<1x32xf32> to vector<8x32xf32>
    %243 = arith.addf %240, %242 : vector<8x32xf32>
    %cst_77 = arith.constant 0.000000e+00 : f32
    %244 = vector.broadcast %cst_77 : f32 to vector<8x32xf32>
    %245 = arith.cmpf oge, %243, %244 : vector<8x32xf32>
    %cst_78 = arith.constant 0.00999999977 : f32
    %246 = vector.broadcast %cst_78 : f32 to vector<8x32xf32>
    %247 = arith.mulf %246, %243 : vector<8x32xf32>
    %248 = arith.select %245, %243, %247 : vector<8x32xi1>, vector<8x32xf32>
    %c0_79 = arith.constant 0 : index
    %c0_80 = arith.constant 0 : index
    %249 = vector.load %arg6[%c0_79, %c0_80] : memref<32x2xf32, #tpu.memory_space<vmem>>, vector<32x2xf32>
    %cst_81 = arith.constant dense<0.000000e+00> : vector<8x2xf32>
    %250 = tpu.matmul %248, %249, %cst_81 {dimension_numbers = #tpu.dot_dimension_numbers<[1], [0], [0], [1], [0, 0, 1, 1], [], []>} : vector<8x32xf32>, vector<32x2xf32>, vector<8x2xf32> -> vector<8x2xf32>
    %c12 = arith.constant 12 : index
    %c0_82 = arith.constant 0 : index
    %251 = vector.load %arg7[%c12, %c0_82] : memref<13x32xf32, #tpu.memory_space<vmem>>, vector<1x2xf32>
    %252 = vector.broadcast %251 : vector<1x2xf32> to vector<8x2xf32>
    %253 = arith.addf %250, %252 : vector<8x2xf32>
    %254 = tpu.iota {dimensions = array<i32: 1>} : vector<8x2xi32>
    %c0_i32 = arith.constant 0 : i32
    %255 = vector.broadcast %c0_i32 : i32 to vector<8x2xi32>
    %256 = arith.cmpi eq, %254, %255 : vector<8x2xi32>
    %257 = math.tanh %253 : vector<8x2xf32>
    %258 = arith.negf %253 : vector<8x2xf32>
    %259 = math.exp %258 : vector<8x2xf32>
    %cst_83 = arith.constant 1.000000e+00 : f32
    %260 = vector.broadcast %cst_83 : f32 to vector<8x2xf32>
    %261 = arith.addf %260, %259 : vector<8x2xf32>
    %262 = arith.divf %260, %261 : vector<8x2xf32>
    %263 = arith.select %256, %257, %262 : vector<8x2xi1>, vector<8x2xf32>
    %c0_84 = arith.constant 0 : index
    %c0_85 = arith.constant 0 : index
    %264 = vector.load %arg8[%c0_84, %c0_85] : memref<8x2xf32, #tpu.memory_space<vmem>>, vector<8x2xf32>
    tpu.vector_store %arg8[%c0_84, %c0_85], %263 {strides = array<i32>} : memref<8x2xf32, #tpu.memory_space<vmem>>, vector<8x2xf32>,
    return
  }
  func.func @transform_0(%arg0: i32) -> (i32, i32) {
    %c0_i32 = arith.constant 0 : i32
    %c0_i32_0 = arith.constant 0 : i32
    return %arg0, %c0_i32 : i32, i32
  }
  func.func @transform_1(%arg0: i32) -> (i32, i32) {
    %c0_i32 = arith.constant 0 : i32
    %c0_i32_0 = arith.constant 0 : i32
    %c0_i32_1 = arith.constant 0 : i32
    return %c0_i32, %c0_i32_0 : i32, i32
  }
  func.func @transform_2(%arg0: i32) -> (i32, i32) {
    %c0_i32 = arith.constant 0 : i32
    %c0_i32_0 = arith.constant 0 : i32
    %c0_i32_1 = arith.constant 0 : i32
    return %c0_i32, %c0_i32_0 : i32, i32
  }
  func.func @transform_3(%arg0: i32) -> (i32, i32) {
    %c0_i32 = arith.constant 0 : i32
    %c0_i32_0 = arith.constant 0 : i32
    %c0_i32_1 = arith.constant 0 : i32
    return %c0_i32, %c0_i32_0 : i32, i32
  }
  func.func @transform_4(%arg0: i32) -> (i32, i32) {
    %c0_i32 = arith.constant 0 : i32
    %c0_i32_0 = arith.constant 0 : i32
    %c0_i32_1 = arith.constant 0 : i32
    return %c0_i32, %c0_i32_0 : i32, i32
  }
  func.func @transform_5(%arg0: i32) -> (i32, i32) {
    %c0_i32 = arith.constant 0 : i32
    %c0_i32_0 = arith.constant 0 : i32
    %c0_i32_1 = arith.constant 0 : i32
    return %c0_i32, %c0_i32_0 : i32, i32
  }
  func.func @transform_6(%arg0: i32) -> (i32, i32) {
    %c0_i32 = arith.constant 0 : i32
    %c0_i32_0 = arith.constant 0 : i32
    %c0_i32_1 = arith.constant 0 : i32
    return %c0_i32, %c0_i32_0 : i32, i32
  }
  func.func @transform_7(%arg0: i32) -> (i32, i32) {
    %c0_i32 = arith.constant 0 : i32
    %c0_i32_0 = arith.constant 0 : i32
    return %arg0, %c0_i32 : i32, i32
  }
}

</mosaic_0001>

<llo_original>
// kernel: tpu_custom_call.1
$region0: #{tpu_custom_call.1}
  #allocation0 [shape = 'u32[]', space=smem, size = 0x4, offset = 0x4, fixed_abs, tag = 'smem constant byte address 0x4 - core index']
  #allocation1 [shape = 'u32[144,128]{1,0:T(1,128)}', space=vmem, size = 0x12000, scoped, tag = 'internal scratch']
  %s0 = inlined_call_operand.vmem [shape: f32[16,16], index: 0, kind: input, shape index: {}]
  %s1 = inlined_call_operand.vmem [shape: f32[6,32], index: 1, kind: input, shape index: {}]
  %s2 = inlined_call_operand.vmem [shape: f32[96,16], index: 2, kind: input, shape index: {}]
  %s3 = inlined_call_operand.vmem [shape: f32[48,32], index: 3, kind: input, shape index: {}]
  %s4 = inlined_call_operand.vmem [shape: f32[32,32], index: 4, kind: input, shape index: {}]
  %s5 = inlined_call_operand.vmem [shape: f32[32,2], index: 5, kind: input, shape index: {}]
  %s6 = inlined_call_operand.vmem [shape: f32[13,32], index: 6, kind: input, shape index: {}]
  %s7 = inlined_call_operand.vmem [shape: f32[16,2], index: 7, kind: output, shape index: {}]
  %s8 = sld [smem:[#allocation0]]
  $region61: #{tpu_custom_call.1} parent=0
    _
  %s10 = ssub.s32 1, %s8
  %s11 = scalar_select 0, %s10, %s8
  loop: start=0, step=1, limit=4
  $region2: #{tpu_custom_call.1} parent=0 // loop_pre_header
    _
  $region3: #{tpu_custom_call.1} parent=0 // loop_header
    %s13 = sphi 0, %s17
    %p14 = scmp.ge.s32.totalorder %s13, 4
    %s23 = sphi 0, %s25
    %s26 = sphi 0, %s23
    %s27 = sphi 0, %s26
    %s43 = sphi 0, %s27
    %s47 = sphi 0, %s47
    %s49 = sphi 0, %s47
    %s50 = sphi 0, %s49
    %s64 = sphi 0, %s50
    %s68 = sphi 0, %s68
    %s70 = sphi 0, %s68
    %s71 = sphi 0, %s70
    %s85 = sphi 0, %s71
    %s89 = sphi 0, %s89
    %s91 = sphi 0, %s89
    %s92 = sphi 0, %s91
    %s106 = sphi 0, %s92
    %s110 = sphi 0, %s110
    %s112 = sphi 0, %s110
    %s113 = sphi 0, %s112
    %s127 = sphi 0, %s113
    %s131 = sphi 0, %s131
    %s133 = sphi 0, %s131
    %s134 = sphi 0, %s133
    %s148 = sphi 0, %s134
    %s152 = sphi 0, %s152
    %s154 = sphi 0, %s152
    %s155 = sphi 0, %s154
    %s169 = sphi 0, %s155
    %s175 = sphi 0, %s177
    %s178 = sphi 0, %s175
    %s179 = sphi 0, %s178
    %s195 = sphi 0, %s179
  $region4: #{tpu_custom_call.1} parent=0 // loop_header_branch
    %16 = sbr.rel (%p14) target = $region8
  $region5: #{tpu_custom_call.1} parent=0 // loop_body
    %s18 = ssub.s32 %s13, 1
    %s19 = ssub.s32 %s13, 2
    %s20 = sadd.s32 %s13, 1
    %s21 = ssub.s32 %s13, %s20
    %p22 = scmp.eq.s32.totalorder %s21, 0
    %s24 = sadd.s32 %s23, 1
    %s25 = scalar_select %p22, %s23, %s24
    %p28 = pneg %p22
    %p29 = scmp.eq.s32.totalorder %s13, 1
    %p30 = por %p28, %p29
    %p31 = scmp.ne.s32.totalorder %s23, %s26
    %p32 = scmp.eq.s32.totalorder %s13, 0
    %p33 = por %p31, %p32
    %p34 = scmp.ne.s32.totalorder %s23, %s26
    %p35 = scmp.eq.s32.totalorder %s18, 1
    %p36 = por %p34, %p35
    %p37 = scmp.ne.s32.totalorder %s26, %s27
    %p38 = scmp.eq.s32.totalorder %s18, 0
    %p39 = por %p37, %p38
    %p40 = scmp.ne.s32.totalorder %s26, %s27
    %p41 = scmp.eq.s32.totalorder %s19, 1
    %p42 = por %p40, %p41
    %p44 = scmp.ne.s32.totalorder %s27, %s43
    %p45 = scmp.eq.s32.totalorder %s19, 0
    %p46 = por %p44, %p45
    %s48 = sadd.s32 %s47, 1
    %p51 = scmp.eq.s32.totalorder %s13, 1
    %p52 = scmp.ne.s32.totalorder %s47, %s49
    %p53 = scmp.eq.s32.totalorder %s13, 0
    %p54 = por %p52, %p53
    %p55 = scmp.ne.s32.totalorder %s47, %s49
    %p56 = scmp.eq.s32.totalorder %s18, 1
    %p57 = por %p55, %p56
    %p58 = scmp.ne.s32.totalorder %s49, %s50
    %p59 = scmp.eq.s32.totalorder %s18, 0
    %p60 = por %p58, %p59
    %p61 = scmp.ne.s32.totalorder %s49, %s50
    %p62 = scmp.eq.s32.totalorder %s19, 1
    %p63 = por %p61, %p62
    %p65 = scmp.ne.s32.totalorder %s50, %s64
    %p66 = scmp.eq.s32.totalorder %s19, 0
    %p67 = por %p65, %p66
    %s69 = sadd.s32 %s68, 1
    %p72 = scmp.eq.s32.totalorder %s13, 1
    %p73 = scmp.ne.s32.totalorder %s68, %s70
    %p74 = scmp.eq.s32.totalorder %s13, 0
    %p75 = por %p73, %p74
    %p76 = scmp.ne.s32.totalorder %s68, %s70
    %p77 = scmp.eq.s32.totalorder %s18, 1
    %p78 = por %p76, %p77
    %p79 = scmp.ne.s32.totalorder %s70, %s71
    %p80 = scmp.eq.s32.totalorder %s18, 0
    %p81 = por %p79, %p80
    %p82 = scmp.ne.s32.totalorder %s70, %s71
    %p83 = scmp.eq.s32.totalorder %s19, 1
    %p84 = por %p82, %p83
    %p86 = scmp.ne.s32.totalorder %s71, %s85
    %p87 = scmp.eq.s32.totalorder %s19, 0
    %p88 = por %p86, %p87
    %s90 = sadd.s32 %s89, 1
    %p93 = scmp.eq.s32.totalorder %s13, 1
    %p94 = scmp.ne.s32.totalorder %s89, %s91
    %p95 = scmp.eq.s32.totalorder %s13, 0
    %p96 = por %p94, %p95
    %p97 = scmp.ne.s32.totalorder %s89, %s91
    %p98 = scmp.eq.s32.totalorder %s18, 1
    %p99 = por %p97, %p98
    %p100 = scmp.ne.s32.totalorder %s91, %s92
    %p101 = scmp.eq.s32.totalorder %s18, 0
    %p102 = por %p100, %p101
    %p103 = scmp.ne.s32.totalorder %s91, %s92
    %p104 = scmp.eq.s32.totalorder %s19, 1
    %p105 = por %p103, %p104
    %p107 = scmp.ne.s32.totalorder %s92, %s106
    %p108 = scmp.eq.s32.totalorder %s19, 0
    %p109 = por %p107, %p108
    %s111 = sadd.s32 %s110, 1
    %p114 = scmp.eq.s32.totalorder %s13, 1
    %p115 = scmp.ne.s32.totalorder %s110, %s112
    %p116 = scmp.eq.s32.totalorder %s13, 0
    %p117 = por %p115, %p116
    %p118 = scmp.ne.s32.totalorder %s110, %s112
    %p119 = scmp.eq.s32.totalorder %s18, 1
    %p120 = por %p118, %p119
    %p121 = scmp.ne.s32.totalorder %s112, %s113
    %p122 = scmp.eq.s32.totalorder %s18, 0
    %p123 = por %p121, %p122
    %p124 = scmp.ne.s32.totalorder %s112, %s113
    %p125 = scmp.eq.s32.totalorder %s19, 1
    %p126 = por %p124, %p125
    %p128 = scmp.ne.s32.totalorder %s113, %s127
    %p129 = scmp.eq.s32.totalorder %s19, 0
    %p130 = por %p128, %p129
    %s132 = sadd.s32 %s131, 1
    %p135 = scmp.eq.s32.totalorder %s13, 1
    %p136 = scmp.ne.s32.totalorder %s131, %s133
    %p137 = scmp.eq.s32.totalorder %s13, 0
    %p138 = por %p136, %p137
    %p139 = scmp.ne.s32.totalorder %s131, %s133
    %p140 = scmp.eq.s32.totalorder %s18, 1
    %p141 = por %p139, %p140
    %p142 = scmp.ne.s32.totalorder %s133, %s134
    %p143 = scmp.eq.s32.totalorder %s18, 0
    %p144 = por %p142, %p143
    %p145 = scmp.ne.s32.totalorder %s133, %s134
    %p146 = scmp.eq.s32.totalorder %s19, 1
    %p147 = por %p145, %p146
    %p149 = scmp.ne.s32.totalorder %s134, %s148
    %p150 = scmp.eq.s32.totalorder %s19, 0
    %p151 = por %p149, %p150
    %s153 = sadd.s32 %s152, 1
    %p156 = scmp.eq.s32.totalorder %s13, 1
    %p157 = scmp.ne.s32.totalorder %s152, %s154
    %p158 = scmp.eq.s32.totalorder %s13, 0
    %p159 = por %p157, %p158
    %p160 = scmp.ne.s32.totalorder %s152, %s154
    %p161 = scmp.eq.s32.totalorder %s18, 1
    %p162 = por %p160, %p161
    %p163 = scmp.ne.s32.totalorder %s154, %s155
    %p164 = scmp.eq.s32.totalorder %s18, 0
    %p165 = por %p163, %p164
    %p166 = scmp.ne.s32.totalorder %s154, %s155
    %p167 = scmp.eq.s32.totalorder %s19, 1
    %p168 = por %p166, %p167
    %p170 = scmp.ne.s32.totalorder %s155, %s169
    %p171 = scmp.eq.s32.totalorder %s19, 0
    %p172 = por %p170, %p171
    %s173 = ssub.s32 %s13, %s20
    %p174 = scmp.eq.s32.totalorder %s173, 0
    %s176 = sadd.s32 %s175, 1
    %s177 = scalar_select %p174, %s175, %s176
    %p180 = pneg %p174
    %p181 = scmp.eq.s32.totalorder %s13, 1
    %p182 = por %p180, %p181
    %p183 = scmp.ne.s32.totalorder %s175, %s178
    %p184 = scmp.eq.s32.totalorder %s13, 0
    %p185 = por %p183, %p184
    %p186 = scmp.ne.s32.totalorder %s175, %s178
    %p187 = scmp.eq.s32.totalorder %s18, 1
    %p188 = por %p186, %p187
    %p189 = scmp.ne.s32.totalorder %s178, %s179
    %p190 = scmp.eq.s32.totalorder %s18, 0
    %p191 = por %p189, %p190
    %p192 = scmp.ne.s32.totalorder %s178, %s179
    %p193 = scmp.eq.s32.totalorder %s19, 1
    %p194 = por %p192, %p193
    %p196 = scmp.ne.s32.totalorder %s179, %s195
    %p197 = scmp.eq.s32.totalorder %s19, 0
    %p198 = por %p196, %p197
    %p199 = scmp.le.s32.totalorder 1, %s13
    %p200 = scmp.lt.s32.totalorder %s13, 3
    %p201 = pnand %p199, %p200
    %p202 = pneg %p201
    // Predicated region
    $region9: #{tpu_custom_call.1} parent=5 // pred_check
      _
    $region10: #{tpu_custom_call.1} parent=5 // pred_check_branch
      %204 = sbr.rel (%p201) target = $region12
    $region11: #{tpu_custom_call.1} parent=5 // pred_region
      %s205 = ssub.s32 %s13, 1
      // Predicated region
      $region13: #{tpu_custom_call.1} parent=11 // pred_check
        %p206 = pneg %p60
      $region14: #{tpu_custom_call.1} parent=11 // pred_check_branch
        %208 = sbr.rel (%p206) target = $region16
      $region15: #{tpu_custom_call.1} parent=11 // pred_region
        _
      $region16: #{tpu_custom_call.1} parent=11 // pred_fallthru
        _
      // Predicated region
      $region17: #{tpu_custom_call.1} parent=11 // pred_check
        %p209 = pneg %p81
      $region18: #{tpu_custom_call.1} parent=11 // pred_check_branch
        %211 = sbr.rel (%p209) target = $region20
      $region19: #{tpu_custom_call.1} parent=11 // pred_region
        _
      $region20: #{tpu_custom_call.1} parent=11 // pred_fallthru
        _
      // Predicated region
      $region21: #{tpu_custom_call.1} parent=11 // pred_check
        %p212 = pneg %p102
      $region22: #{tpu_custom_call.1} parent=11 // pred_check_branch
        %214 = sbr.rel (%p212) target = $region24
      $region23: #{tpu_custom_call.1} parent=11 // pred_region
        _
      $region24: #{tpu_custom_call.1} parent=11 // pred_fallthru
        _
      // Predicated region
      $region25: #{tpu_custom_call.1} parent=11 // pred_check
        %p215 = pneg %p123
      $region26: #{tpu_custom_call.1} parent=11 // pred_check_branch
        %217 = sbr.rel (%p215) target = $region28
      $region27: #{tpu_custom_call.1} parent=11 // pred_region
        _
      $region28: #{tpu_custom_call.1} parent=11 // pred_fallthru
        _
      // Predicated region
      $region29: #{tpu_custom_call.1} parent=11 // pred_check
        %p218 = pneg %p144
      $region30: #{tpu_custom_call.1} parent=11 // pred_check_branch
        %220 = sbr.rel (%p218) target = $region32
      $region31: #{tpu_custom_call.1} parent=11 // pred_region
        _
      $region32: #{tpu_custom_call.1} parent=11 // pred_fallthru
        _
      // Predicated region
      $region33: #{tpu_custom_call.1} parent=11 // pred_check
        %p221 = pneg %p165
      $region34: #{tpu_custom_call.1} parent=11 // pred_check_branch
        %223 = sbr.rel (%p221) target = $region36
      $region35: #{tpu_custom_call.1} parent=11 // pred_region
        _
      $region36: #{tpu_custom_call.1} parent=11 // pred_fallthru
        _
    $region12: #{tpu_custom_call.1} parent=5 // pred_fallthru
      _
    %p224 = scmp.lt.s32.totalorder %s13, 2
    // Predicated region
    $region37: #{tpu_custom_call.1} parent=5 // pred_check
      %p225 = pneg %p224
    $region38: #{tpu_custom_call.1} parent=5 // pred_check_branch
      %227 = sbr.rel (%p225) target = $region40
    $region39: #{tpu_custom_call.1} parent=5 // pred_region
      // Predicated region
      $region41: #{tpu_custom_call.1} parent=39 // pred_check
        %p228 = pneg %p33
      $region42: #{tpu_custom_call.1} parent=39 // pred_check_branch
        %230 = sbr.rel (%p228) target = $region44
      $region43: #{tpu_custom_call.1} parent=39 // pred_region
        %p231 = scmp.lt.s32.totalorder %s13, 1
        %s232 = scalar_select %p231, %s13, 1
        %s233 = smul.addr %s232, 8
        %s234 = scalar_lea.vmem %s0, %s233
      $region44: #{tpu_custom_call.1} parent=39 // pred_fallthru
        _
    $region40: #{tpu_custom_call.1} parent=5 // pred_fallthru
      _
    %p235 = scmp.le.s32.totalorder 1, %s13
    %p236 = scmp.lt.s32.totalorder %s13, 3
    %p237 = pnand %p235, %p236
    %p238 = pneg %p237
    // Predicated region
    $region45: #{tpu_custom_call.1} parent=5 // pred_check
      _
    $region46: #{tpu_custom_call.1} parent=5 // pred_check_branch
      %240 = sbr.rel (%p237) target = $region48
    $region47: #{tpu_custom_call.1} parent=5 // pred_region
      %s241 = ssub.s32 %s13, 1
      %p242 = scmp.lt.s32.totalorder %s18, 1
      %s243 = scalar_select %p242, %s18, 1
      %s244 = smul.addr %s243, 8
      %s245 = scalar_lea.vmem %s0, %s244
      %p246 = pneg %p39
      %p247 = pneg %p36
      %p248 = pneg %p60
      %p249 = pneg %p57
      %p250 = pneg %p81
      %p251 = pneg %p78
      %p252 = pneg %p102
      %p253 = pneg %p99
      %p254 = pneg %p123
      %p255 = pneg %p120
      %p256 = pneg %p144
      %p257 = pneg %p141
      %p258 = pneg %p165
      %p259 = pneg %p162
      %p260 = pneg %p191
      %p261 = pneg %p188
      %p262 = scmp.lt.s32.totalorder %s18, 1
      %s263 = scalar_select %p262, %s18, 1
      %s264 = smul.addr %s263, 8
      %s265 = scalar_lea.vmem %s7, %s264
      %p266 = scmp.lt.s32.totalorder %s18, 1
      %s267 = scalar_select %p266, %s18, 1
      %s268 = smul.addr %s267, 8
      %s269 = scalar_lea.vmem %s0, %s268
      %p270 = scmp.lt.s32.totalorder %s18, 1
      %s271 = scalar_select %p270, %s18, 1
      %s272 = smul.addr %s271, 8
      %s273 = scalar_lea.vmem %s7, %s272
      %v274 = vld [vmem:[%s269] sm:$0xff]
      %v275 = vld [vmem:[%s1] sm:$0x1]
      %v276 = vld [vmem:[%s1 + $0x1] sm:$0x1]
      %278 = vset.pattern.permute.xlu0 0
      %279 = vperm.xlu0 %278, %v274
      %v280 = vpop.permute.xlu0 %279
      %v282 = vlaneseq
      %v283 = vshrl.u32 %v282, 7
      %v284 = vsub.s32 0, %v283
      %v285 = vrot.slane %v275, %v284
      %v286 = vmul.f32 %v280, %v285
      %287 = vset.pattern.permute.xlu0 1
      %288 = vperm.xlu0 %287, %v274
      %v289 = vpop.permute.xlu0 %288
      %v291 = vlaneseq
      %v292 = vshrl.u32 %v291, 7
      %v293 = vsub.s32 0, %v292
      %v294 = vrot.slane %v276, %v293
      %v295 = vmul.f32 %v289, %v294
      %v296 = vadd.f32 %v286, %v295
      %v297 = vld [vmem:[%s6] sm:$0x1]
      %v298 = vlaneseq
      %v299 = vshrl.u32 %v298, 7
      %v300 = vsub.s32 0, %v299
      %v301 = vrot.slane %v297, %v300
      %v302 = vadd.f32 %v296, %v301
      %v303 = vmax.f32 %v302, 0.0
      %v304 = vld [vmem:[%s2] sm:$0xff]
      %v305 = vld [vmem:[%s2 + $0x8] sm:$0xff]
      %v306 = vld [vmem:[%s2 + $0x10] sm:$0xff]
      %v307 = vld [vmem:[%s2 + $0x18] sm:$0xff]
      %v308 = vld [vmem:[%s6 + $0x1] sm:$0x1]
      %v309 = vlaneseq
      %v310 = vshrl.u32 %v309, 7
      %v311 = vsub.s32 0, %v310
      %v312 = vrot.slane %v308, %v311
      %vm313 = vcmask 261120
      %v315 = vsel %vm313, %v303, 0
      %317 = vmatprep.subr.mxu0 0.0
      %318 = vmatpush1.msra.mxu0 %v304
      %319 = vmatprep.subr.mxu0 0.0
      %320 = vmatpush1.msra.mxu0 %v305
      %321 = vmatprep.subr.mxu0 0.0
      %322 = vmatpush1.msra.mxu0 %v306
      %323 = vmatprep.subr.mxu0 0.0
      %324 = vmatpush1.msra.mxu0 %v307
      %325 = vmatprep.subr.mxu0 0.0
      %326 = vmatpush1.msra.mxu0 0.0
      %327 = vmatprep.subr.mxu0 0.0
      %328 = vmatpush1.msra.mxu0 0.0
      %329 = vmatprep.subr.mxu0 0.0
      %330 = vmatpush1.msra.mxu0 0.0
      %331 = vmatprep.subr.mxu0 0.0
      %332 = vmatpush1.msra.mxu0 0.0
      %333 = vmatprep.subr.mxu0 0.0
      %334 = vmatpush1.msra.mxu0 0.0
      %335 = vmatprep.subr.mxu0 0.0
      %336 = vmatpush1.msra.mxu0 0.0
      %337 = vmatprep.subr.mxu0 0.0
      %338 = vmatpush1.msra.mxu0 0.0
      %339 = vmatprep.subr.mxu0 0.0
      %340 = vmatpush1.msra.mxu0 0.0
      %341 = vmatprep.subr.mxu0 0.0
      %342 = vmatpush1.msra.mxu0 0.0
      %343 = vmatprep.subr.mxu0 0.0
      %344 = vmatpush1.msra.mxu0 0.0
      %345 = vmatprep.subr.mxu0 0.0
      %346 = vmatpush1.msra.mxu0 0.0
      %347 = vmatprep.subr.mxu0 0.0
      %348 = vmatpush1.msra.mxu0 0.0
      %349 = vmatprep.subr.mxu0 0.0
      %350 = vmatpush1.msra.mxu0 0.0
      %351 = vmatprep.subr.mxu0 0.0
      %352 = vmatpush1.msra.mxu0 0.0
      %353 = vmatprep.subr.mxu0 0.0
      %354 = vmatpush1.msra.mxu0 0.0
      %355 = vmatprep.subr.mxu0 0.0
      %356 = vmatpush1.msra.mxu0 0.0
      %357 = vmatprep.subr.mxu0 0.0
      %358 = vmatpush1.msra.mxu0 0.0
      %359 = vmatprep.subr.mxu0 0.0
      %360 = vmatpush1.msra.mxu0 0.0
      %361 = vmatprep.subr.mxu0 0.0
      %362 = vmatpush1.msra.mxu0 0.0
      %363 = vmatprep.subr.mxu0 0.0
      %364 = vmatpush1.msra.mxu0 0.0
      %365 = vmatprep.subr.mxu0 0.0
      %366 = vmatpush1.msra.mxu0 0.0
      %367 = vmatprep.subr.mxu0 0.0
      %368 = vmatpush1.msra.mxu0 0.0
      %369 = vmatprep.subr.mxu0 0.0
      %370 = vmatpush1.msra.mxu0 0.0
      %371 = vmatprep.subr.mxu0 0.0
      %372 = vmatpush1.msra.mxu0 0.0
      %373 = vmatprep.subr.mxu0 0.0
      %374 = vmatpush1.msra.mxu0 0.0
      %375 = vmatprep.subr.mxu0 0.0
      %376 = vmatpush1.msra.mxu0 0.0
      %377 = vmatprep.subr.mxu0 0.0
      %378 = vmatpush1.msra.mxu0 0.0
      %379 = vmatprep.subr.mxu0 0.0
      %380 = vmatpush1.msra.mxu0 0.0
      %381 = vmatprep.mubr.f32.mxu0 0.0
      %382 = vmatmul.mubr.f32.gmra.mrb[0].mxu0 %v315
      %v383 = vpop.f32.mrb[0].mxu0
      %v384 = vadd.f32 %v312, %v383
      %v385 = vpop.f32.mrb[0].mxu0
      %386 = vdwg.mxu0
      %v387 = vmax.f32 %v384, 0.0
      %388 = vrot.lane.b32.xlu0 %v274, 126
      %v389 = vpop.permute.xlu0 %388
      %390 = vrot.lane.b32.xlu0 %v274, 124
      %v391 = vpop.permute.xlu0 %390
      %392 = vrot.lane.b32.xlu0 %v274, 122
      %v393 = vpop.permute.xlu0 %392
      %v394 = vld [vmem:[%s1 + $0x2] sm:$0x1]
      %v395 = vld [vmem:[%s1 + $0x3] sm:$0x1]
      %396 = vset.pattern.permute.xlu0 2
      %397 = vperm.xlu0 %396, %v274
      %v398 = vpop.permute.xlu0 %397
      %400 = vset.pattern.permute.xlu0 2
      %401 = vperm.xlu0 %400, %v389
      %v402 = vpop.permute.xlu0 %401
      %404 = vset.pattern.permute.xlu0 2
      %405 = vperm.xlu0 %404, %v391
      %v406 = vpop.permute.xlu0 %405
      %408 = vset.pattern.permute.xlu0 2
      %409 = vperm.xlu0 %408, %v393
      %v410 = vpop.permute.xlu0 %409
      %v412 = vlaneseq
      %v413 = vshrl.u32 %v412, 7
      %v414 = vsub.s32 0, %v413
      %v415 = vrot.slane %v394, %v414
      %v416 = vmul.f32 %v398, %v415
      %v417 = vmul.f32 %v402, %v415
      %v418 = vmul.f32 %v406, %v415
      %v419 = vmul.f32 %v410, %v415
      %420 = vset.pattern.permute.xlu0 3
      %421 = vperm.xlu0 %420, %v274
      %v422 = vpop.permute.xlu0 %421
      %424 = vset.pattern.permute.xlu0 3
      %425 = vperm.xlu0 %424, %v389
      %v426 = vpop.permute.xlu0 %425
      %428 = vset.pattern.permute.xlu0 3
      %429 = vperm.xlu0 %428, %v391
      %v430 = vpop.permute.xlu0 %429
      %432 = vset.pattern.permute.xlu0 3
      %433 = vperm.xlu0 %432, %v393
      %v434 = vpop.permute.xlu0 %433
      %v436 = vlaneseq
      %v437 = vshrl.u32 %v436, 7
      %v438 = vsub.s32 0, %v437
      %v439 = vrot.slane %v395, %v438
      %v440 = vmul.f32 %v422, %v439
      %v441 = vmul.f32 %v426, %v439
      %v442 = vmul.f32 %v430, %v439
      %v443 = vmul.f32 %v434, %v439
      %v444 = vadd.f32 %v416, %v440
      %v445 = vadd.f32 %v417, %v441
      %v446 = vadd.f32 %v418, %v442
      %v447 = vadd.f32 %v419, %v443
      %v448 = vld [vmem:[%s6 + $0x2] sm:$0x1]
      %v449 = vlaneseq
      %v450 = vshrl.u32 %v449, 7
      %v451 = vsub.s32 0, %v450
      %v452 = vrot.slane %v448, %v451
      %v453 = vadd.f32 %v444, %v452
      %v454 = vadd.f32 %v445, %v452
      %v455 = vadd.f32 %v446, %v452
      %v456 = vadd.f32 %v447, %v452
      %v457 = vmax.f32 %v453, 0.0
      %v458 = vmax.f32 %v454, 0.0
      %v459 = vmax.f32 %v455, 0.0
      %v460 = vmax.f32 %v456, 0.0
      %v461 = vld [vmem:[%s2 + $0x20] sm:$0xff]
      %v462 = vld [vmem:[%s2 + $0x28] sm:$0xff]
      %v463 = vld [vmem:[%s2 + $0x30] sm:$0xff]
      %v464 = vld [vmem:[%s2 + $0x38] sm:$0xff]
      %v465 = vld [vmem:[%s6 + $0x3] sm:$0x1]
      %v466 = vlaneseq
      %v467 = vshrl.u32 %v466, 7
      %v468 = vsub.s32 0, %v467
      %v469 = vrot.slane %v465, %v468
      %v471 = vsel %vm313, %v457, 0
      %v474 = vsel %vm313, %v458, 0
      %v477 = vsel %vm313, %v459, 0
      %v480 = vsel %vm313, %v460, 0
      %482 = vmatprep.subr.mxu0 0.0
      %483 = vmatpush1.msra.mxu0 %v461
      %484 = vmatprep.subr.mxu0 0.0
      %485 = vmatpush1.msra.mxu0 %v462
      %486 = vmatprep.subr.mxu0 0.0
      %487 = vmatpush1.msra.mxu0 %v463
      %488 = vmatprep.subr.mxu0 0.0
      %489 = vmatpush1.msra.mxu0 %v464
      %490 = vmatprep.subr.mxu0 0.0
      %491 = vmatpush1.msra.mxu0 0.0
      %492 = vmatprep.subr.mxu0 0.0
      %493 = vmatpush1.msra.mxu0 0.0
      %494 = vmatprep.subr.mxu0 0.0
      %495 = vmatpush1.msra.mxu0 0.0
      %496 = vmatprep.subr.mxu0 0.0
      %497 = vmatpush1.msra.mxu0 0.0
      %498 = vmatprep.subr.mxu0 0.0
      %499 = vmatpush1.msra.mxu0 0.0
      %500 = vmatprep.subr.mxu0 0.0
      %501 = vmatpush1.msra.mxu0 0.0
      %502 = vmatprep.subr.mxu0 0.0
      %503 = vmatpush1.msra.mxu0 0.0
      %504 = vmatprep.subr.mxu0 0.0
      %505 = vmatpush1.msra.mxu0 0.0
      %506 = vmatprep.subr.mxu0 0.0
      %507 = vmatpush1.msra.mxu0 0.0
      %508 = vmatprep.subr.mxu0 0.0
      %509 = vmatpush1.msra.mxu0 0.0
      %510 = vmatprep.subr.mxu0 0.0
      %511 = vmatpush1.msra.mxu0 0.0
      %512 = vmatprep.subr.mxu0 0.0
      %513 = vmatpush1.msra.mxu0 0.0
      %514 = vmatprep.subr.mxu0 0.0
      %515 = vmatpush1.msra.mxu0 0.0
      %516 = vmatprep.subr.mxu0 0.0
      %517 = vmatpush1.msra.mxu0 0.0
      %518 = vmatprep.subr.mxu0 0.0
      %519 = vmatpush1.msra.mxu0 0.0
      %520 = vmatprep.subr.mxu0 0.0
      %521 = vmatpush1.msra.mxu0 0.0
      %522 = vmatprep.subr.mxu0 0.0
      %523 = vmatpush1.msra.mxu0 0.0
      %524 = vmatprep.subr.mxu0 0.0
      %525 = vmatpush1.msra.mxu0 0.0
      %526 = vmatprep.subr.mxu0 0.0
      %527 = vmatpush1.msra.mxu0 0.0
      %528 = vmatprep.subr.mxu0 0.0
      %529 = vmatpush1.msra.mxu0 0.0
      %530 = vmatprep.subr.mxu0 0.0
      %531 = vmatpush1.msra.mxu0 0.0
      %532 = vmatprep.subr.mxu0 0.0
      %533 = vmatpush1.msra.mxu0 0.0
      %534 = vmatprep.subr.mxu0 0.0
      %535 = vmatpush1.msra.mxu0 0.0
      %536 = vmatprep.subr.mxu0 0.0
      %537 = vmatpush1.msra.mxu0 0.0
      %538 = vmatprep.subr.mxu0 0.0
      %539 = vmatpush1.msra.mxu0 0.0
      %540 = vmatprep.subr.mxu0 0.0
      %541 = vmatpush1.msra.mxu0 0.0
      %542 = vmatprep.subr.mxu0 0.0
      %543 = vmatpush1.msra.mxu0 0.0
      %544 = vmatprep.subr.mxu0 0.0
      %545 = vmatpush1.msra.mxu0 0.0
      %546 = vmatprep.mubr.f32.mxu0 0.0
      %547 = vmatmul.mubr.f32.gmra.mrb[0].mxu0 %v471
      %v548 = vpop.f32.mrb[0].mxu0
      %v549 = vadd.f32 %v469, %v548
      %v550 = vpop.f32.mrb[0].mxu0
      %551 = vmatprep.mubr.f32.mxu0 0.0
      %552 = vmatmul.mubr.f32.gmra.mrb[0].mxu0 %v474
      %v553 = vpop.f32.mrb[0].mxu0
      %v554 = vadd.f32 %v469, %v553
      %v555 = vpop.f32.mrb[0].mxu0
      %556 = vmatprep.mubr.f32.mxu0 0.0
      %557 = vmatmul.mubr.f32.gmra.mrb[0].mxu0 %v477
      %v558 = vpop.f32.mrb[0].mxu0
      %v559 = vadd.f32 %v469, %v558
      %v560 = vpop.f32.mrb[0].mxu0
      %561 = vmatprep.mubr.f32.mxu0 0.0
      %562 = vmatmul.mubr.f32.gmra.mrb[0].mxu0 %v480
      %v563 = vpop.f32.mrb[0].mxu0
      %v564 = vadd.f32 %v469, %v563
      %v565 = vpop.f32.mrb[0].mxu0
      %566 = vdwg.mxu0
      %v567 = vmax.f32 %v549, 0.0
      %v568 = vmax.f32 %v554, 0.0
      %v569 = vmax.f32 %v559, 0.0
      %v570 = vmax.f32 %v564, 0.0
      %v571 = vmul.f32 %v387, %v567
      %vm572 = vcmask 130048
      %v573 = vsel %vm572, %v571, 0.0
      %574 = vadd.xlane.f32.xlu0 %v573
      %v575 = vpop.xlane.xlu0 %574
      %v576 = vmul.f32 %v575, 0.25
      %v577 = vmul.f32 %v387, %v568
      %v578 = vsel %vm572, %v577, 0.0
      %579 = vadd.xlane.f32.xlu0 %v578
      %v580 = vpop.xlane.xlu0 %579
      %v581 = vmul.f32 %v580, 0.25
      %v582 = vmul.f32 %v387, %v569
      %v583 = vsel %vm572, %v582, 0.0
      %584 = vadd.xlane.f32.xlu0 %v583
      %v585 = vpop.xlane.xlu0 %584
      %v586 = vmul.f32 %v585, 0.25
      %v587 = vmul.f32 %v387, %v570
      %v588 = vsel %vm572, %v587, 0.0
      %589 = vadd.xlane.f32.xlu0 %v588
      %v590 = vpop.xlane.xlu0 %589
      %v591 = vmul.f32 %v590, 0.25
      %v592 = vmax.f32 %v576, %v581
      %v593 = vmax.f32 %v592, %v586
      %v594 = vmax.f32 %v593, %v591
      %v595 = vsub.f32 %v576, %v594
      %v596 = vmul.f32 %v595, 1.442695
      %v597 = vpow.pop %v596
      %v598 = vsub.f32 %v581, %v594
      %v599 = vmul.f32 %v598, 1.442695
      %v600 = vpow.pop %v599
      %v601 = vsub.f32 %v586, %v594
      %v602 = vmul.f32 %v601, 1.442695
      %v603 = vpow.pop %v602
      %v604 = vsub.f32 %v591, %v594
      %v605 = vmul.f32 %v604, 1.442695
      %v606 = vpow.pop %v605
      %v607 = vadd.f32 %v597, %v600
      %v608 = vadd.f32 %v607, %v603
      %v609 = vadd.f32 %v608, %v606
      %v610 = vmul.f32 %v597, %v567
      %v611 = vmul.f32 %v600, %v568
      %v612 = vadd.f32 %v610, %v611
      %v613 = vmul.f32 %v603, %v569
      %v614 = vadd.f32 %v612, %v613
      %v615 = vmul.f32 %v606, %v570
      %v616 = vadd.f32 %v614, %v615
      %v617 = vrcp.pop %v609
      %v618 = vmul.f32 %v616, %v617
      %v619 = vld [vmem:[%s6 + $0x4] sm:$0x1]
      %v620 = vld [vmem:[%s6 + $0x5] sm:$0x1]
      %v621 = vsel %vm572, %v618, 0.0
      %622 = vadd.xlane.f32.xlu0 %v621
      %v623 = vpop.xlane.xlu0 %622
      %v624 = vrcp.pop 16.0
      %v625 = vmul.f32 %v623, %v624
      %v626 = vsub.f32 %v618, %v625
      %v627 = vmul.f32 %v626, %v626
      %v628 = vsel %vm572, %v627, 0.0
      %629 = vadd.xlane.f32.xlu0 %v628
      %v630 = vpop.xlane.xlu0 %629
      %v631 = vmul.f32 %v630, %v624
      %v632 = vadd.f32 %v631, 1e-05
      %v633 = vrsqrt.pop %v632
      %v634 = vmul.f32 %v626, %v633
      %v635 = vlaneseq
      %v636 = vshrl.u32 %v635, 7
      %v637 = vsub.s32 0, %v636
      %v638 = vrot.slane %v619, %v637
      %v639 = vmul.f32 %v634, %v638
      %v640 = vlaneseq
      %v641 = vshrl.u32 %v640, 7
      %v642 = vsub.s32 0, %v641
      %v643 = vrot.slane %v620, %v642
      %v644 = vadd.f32 %v639, %v643
      %v645 = vmax.f32 %v644, 0.0
      %v646 = vld [vmem:[%s1 + $0x4] sm:$0x1]
      %v647 = vld [vmem:[%s1 + $0x5] sm:$0x1]
      %648 = vset.pattern.permute.xlu0 10
      %649 = vperm.xlu0 %648, %v274
      %v650 = vpop.permute.xlu0 %649
      %652 = vset.pattern.permute.xlu0 10
      %653 = vperm.xlu0 %652, %v389
      %v654 = vpop.permute.xlu0 %653
      %656 = vset.pattern.permute.xlu0 10
      %657 = vperm.xlu0 %656, %v391
      %v658 = vpop.permute.xlu0 %657
      %v660 = vlaneseq
      %v661 = vshrl.u32 %v660, 7
      %v662 = vsub.s32 0, %v661
      %v663 = vrot.slane %v646, %v662
      %v664 = vmul.f32 %v650, %v663
      %v665 = vmul.f32 %v654, %v663
      %v666 = vmul.f32 %v658, %v663
      %667 = vset.pattern.permute.xlu0 11
      %668 = vperm.xlu0 %667, %v274
      %v669 = vpop.permute.xlu0 %668
      %671 = vset.pattern.permute.xlu0 11
      %672 = vperm.xlu0 %671, %v389
      %v673 = vpop.permute.xlu0 %672
      %675 = vset.pattern.permute.xlu0 11
      %676 = vperm.xlu0 %675, %v391
      %v677 = vpop.permute.xlu0 %676
      %v679 = vlaneseq
      %v680 = vshrl.u32 %v679, 7
      %v681 = vsub.s32 0, %v680
      %v682 = vrot.slane %v647, %v681
      %v683 = vmul.f32 %v669, %v682
      %v684 = vmul.f32 %v673, %v682
      %v685 = vmul.f32 %v677, %v682
      %v686 = vadd.f32 %v664, %v683
      %v687 = vadd.f32 %v665, %v684
      %v688 = vadd.f32 %v666, %v685
      %v689 = vld [vmem:[%s6 + $0x6] sm:$0x1]
      %v690 = vlaneseq
      %v691 = vshrl.u32 %v690, 7
      %v692 = vsub.s32 0, %v691
      %v693 = vrot.slane %v689, %v692
      %v694 = vadd.f32 %v686, %v693
      %v695 = vadd.f32 %v687, %v693
      %v696 = vadd.f32 %v688, %v693
      %v697 = vmax.f32 %v694, 0.0
      %v698 = vmax.f32 %v695, 0.0
      %v699 = vmax.f32 %v696, 0.0
      %v700 = vld [vmem:[%s2 + $0x40] sm:$0xff]
      %v701 = vld [vmem:[%s2 + $0x48] sm:$0xff]
      %v702 = vld [vmem:[%s2 + $0x50] sm:$0xff]
      %v703 = vld [vmem:[%s2 + $0x58] sm:$0xff]
      %v704 = vld [vmem:[%s6 + $0x7] sm:$0x1]
      %v705 = vlaneseq
      %v706 = vshrl.u32 %v705, 7
      %v707 = vsub.s32 0, %v706
      %v708 = vrot.slane %v704, %v707
      %v710 = vsel %vm313, %v697, 0
      %v713 = vsel %vm313, %v698, 0
      %v716 = vsel %vm313, %v699, 0
      %718 = vmatprep.subr.mxu0 0.0
      %719 = vmatpush1.msra.mxu0 %v700
      %720 = vmatprep.subr.mxu0 0.0
      %721 = vmatpush1.msra.mxu0 %v701
      %722 = vmatprep.subr.mxu0 0.0
      %723 = vmatpush1.msra.mxu0 %v702
      %724 = vmatprep.subr.mxu0 0.0
      %725 = vmatpush1.msra.mxu0 %v703
      %726 = vmatprep.subr.mxu0 0.0
      %727 = vmatpush1.msra.mxu0 0.0
      %728 = vmatprep.subr.mxu0 0.0
      %729 = vmatpush1.msra.mxu0 0.0
      %730 = vmatprep.subr.mxu0 0.0
      %731 = vmatpush1.msra.mxu0 0.0
      %732 = vmatprep.subr.mxu0 0.0
      %733 = vmatpush1.msra.mxu0 0.0
      %734 = vmatprep.subr.mxu0 0.0
      %735 = vmatpush1.msra.mxu0 0.0
      %736 = vmatprep.subr.mxu0 0.0
      %737 = vmatpush1.msra.mxu0 0.0
      %738 = vmatprep.subr.mxu0 0.0
      %739 = vmatpush1.msra.mxu0 0.0
      %740 = vmatprep.subr.mxu0 0.0
      %741 = vmatpush1.msra.mxu0 0.0
      %742 = vmatprep.subr.mxu0 0.0
      %743 = vmatpush1.msra.mxu0 0.0
      %744 = vmatprep.subr.mxu0 0.0
      %745 = vmatpush1.msra.mxu0 0.0
      %746 = vmatprep.subr.mxu0 0.0
      %747 = vmatpush1.msra.mxu0 0.0
      %748 = vmatprep.subr.mxu0 0.0
      %749 = vmatpush1.msra.mxu0 0.0
      %750 = vmatprep.subr.mxu0 0.0
      %751 = vmatpush1.msra.mxu0 0.0
      %752 = vmatprep.subr.mxu0 0.0
      %753 = vmatpush1.msra.mxu0 0.0
      %754 = vmatprep.subr.mxu0 0.0
      %755 = vmatpush1.msra.mxu0 0.0
      %756 = vmatprep.subr.mxu0 0.0
      %757 = vmatpush1.msra.mxu0 0.0
      %758 = vmatprep.subr.mxu0 0.0
      %759 = vmatpush1.msra.mxu0 0.0
      %760 = vmatprep.subr.mxu0 0.0
      %761 = vmatpush1.msra.mxu0 0.0
      %762 = vmatprep.subr.mxu0 0.0
      %763 = vmatpush1.msra.mxu0 0.0
      %764 = vmatprep.subr.mxu0 0.0
      %765 = vmatpush1.msra.mxu0 0.0
      %766 = vmatprep.subr.mxu0 0.0
      %767 = vmatpush1.msra.mxu0 0.0
      %768 = vmatprep.subr.mxu0 0.0
      %769 = vmatpush1.msra.mxu0 0.0
      %770 = vmatprep.subr.mxu0 0.0
      %771 = vmatpush1.msra.mxu0 0.0
      %772 = vmatprep.subr.mxu0 0.0
      %773 = vmatpush1.msra.mxu0 0.0
      %774 = vmatprep.subr.mxu0 0.0
      %775 = vmatpush1.msra.mxu0 0.0
      %776 = vmatprep.subr.mxu0 0.0
      %777 = vmatpush1.msra.mxu0 0.0
      %778 = vmatprep.subr.mxu0 0.0
      %779 = vmatpush1.msra.mxu0 0.0
      %780 = vmatprep.subr.mxu0 0.0
      %781 = vmatpush1.msra.mxu0 0.0
      %782 = vmatprep.mubr.f32.mxu0 0.0
      %783 = vmatmul.mubr.f32.gmra.mrb[0].mxu0 %v710
      %v784 = vpop.f32.mrb[0].mxu0
      %v785 = vadd.f32 %v708, %v784
      %v786 = vpop.f32.mrb[0].mxu0
      %787 = vmatprep.mubr.f32.mxu0 0.0
      %788 = vmatmul.mubr.f32.gmra.mrb[0].mxu0 %v713
      %v789 = vpop.f32.mrb[0].mxu0
      %v790 = vadd.f32 %v708, %v789
      %v791 = vpop.f32.mrb[0].mxu0
      %792 = vmatprep.mubr.f32.mxu0 0.0
      %793 = vmatmul.mubr.f32.gmra.mrb[0].mxu0 %v716
      %v794 = vpop.f32.mrb[0].mxu0
      %v795 = vadd.f32 %v708, %v794
      %v796 = vpop.f32.mrb[0].mxu0
      %797 = vdwg.mxu0
      %v798 = vmax.f32 %v785, 0.0
      %v799 = vmax.f32 %v790, 0.0
      %v800 = vmax.f32 %v795, 0.0
      %v801 = vmul.f32 %v387, %v798
      %v802 = vsel %vm572, %v801, 0.0
      %803 = vadd.xlane.f32.xlu0 %v802
      %v804 = vpop.xlane.xlu0 %803
      %v805 = vmul.f32 %v804, 0.25
      %v806 = vmul.f32 %v387, %v799
      %v807 = vsel %vm572, %v806, 0.0
      %808 = vadd.xlane.f32.xlu0 %v807
      %v809 = vpop.xlane.xlu0 %808
      %v810 = vmul.f32 %v809, 0.25
      %v811 = vmul.f32 %v387, %v800
      %v812 = vsel %vm572, %v811, 0.0
      %813 = vadd.xlane.f32.xlu0 %v812
      %v814 = vpop.xlane.xlu0 %813
      %v815 = vmul.f32 %v814, 0.25
      %v816 = vmax.f32 %v805, %v810
      %v817 = vmax.f32 %v816, %v815
      %v818 = vsub.f32 %v805, %v817
      %v819 = vmul.f32 %v818, 1.442695
      %v820 = vpow.pop %v819
      %v821 = vsub.f32 %v810, %v817
      %v822 = vmul.f32 %v821, 1.442695
      %v823 = vpow.pop %v822
      %v824 = vsub.f32 %v815, %v817
      %v825 = vmul.f32 %v824, 1.442695
      %v826 = vpow.pop %v825
      %v827 = vadd.f32 %v820, %v823
      %v828 = vadd.f32 %v827, %v826
      %v829 = vmul.f32 %v820, %v798
      %v830 = vmul.f32 %v823, %v799
      %v831 = vadd.f32 %v829, %v830
      %v832 = vmul.f32 %v826, %v800
      %v833 = vadd.f32 %v831, %v832
      %v834 = vrcp.pop %v828
      %v835 = vmul.f32 %v833, %v834
      %v836 = vld [vmem:[%s6 + $0x8] sm:$0x1]
      %v837 = vld [vmem:[%s6 + $0x9] sm:$0x1]
      %v838 = vsel %vm572, %v835, 0.0
      %839 = vadd.xlane.f32.xlu0 %v838
      %v840 = vpop.xlane.xlu0 %839
      %v841 = vmul.f32 %v840, %v624
      %v842 = vsub.f32 %v835, %v841
      %v843 = vmul.f32 %v842, %v842
      %v844 = vsel %vm572, %v843, 0.0
      %845 = vadd.xlane.f32.xlu0 %v844
      %v846 = vpop.xlane.xlu0 %845
      %v847 = vmul.f32 %v846, %v624
      %v848 = vadd.f32 %v847, 1e-05
      %v849 = vrsqrt.pop %v848
      %v850 = vmul.f32 %v842, %v849
      %v851 = vlaneseq
      %v852 = vshrl.u32 %v851, 7
      %v853 = vsub.s32 0, %v852
      %v854 = vrot.slane %v836, %v853
      %v855 = vmul.f32 %v850, %v854
      %v856 = vlaneseq
      %v857 = vshrl.u32 %v856, 7
      %v858 = vsub.s32 0, %v857
      %v859 = vrot.slane %v837, %v858
      %v860 = vadd.f32 %v855, %v859
      %v861 = vmax.f32 %v860, 0.0
      %v862 = vld [vmem:[%s3] sm:$0xff]
      %v863 = vld [vmem:[%s3 + $0x8] sm:$0xff]
      %v864 = vld [vmem:[%s3 + $0x10] sm:$0xff]
      %v865 = vld [vmem:[%s3 + $0x18] sm:$0xff]
      %v867 = vsel %vm572, %v645, 0
      %869 = vmatprep.subr.mxu0 0.0
      %870 = vmatpush1.msra.mxu0 %v864
      %871 = vmatprep.subr.mxu0 0.0
      %872 = vmatpush1.msra.mxu0 %v865
      %873 = vmatprep.subr.mxu0 0.0
      %874 = vmatpush1.msra.mxu0 0.0
      %875 = vmatprep.subr.mxu0 0.0
      %876 = vmatpush1.msra.mxu0 0.0
      %877 = vmatprep.subr.mxu0 0.0
      %878 = vmatpush1.msra.mxu0 0.0
      %879 = vmatprep.subr.mxu0 0.0
      %880 = vmatpush1.msra.mxu0 0.0
      %881 = vmatprep.subr.mxu0 0.0
      %882 = vmatpush1.msra.mxu0 0.0
      %883 = vmatprep.subr.mxu0 0.0
      %884 = vmatpush1.msra.mxu0 0.0
      %885 = vmatprep.subr.mxu0 0.0
      %886 = vmatpush1.msra.mxu0 0.0
      %887 = vmatprep.subr.mxu0 0.0
      %888 = vmatpush1.msra.mxu0 0.0
      %889 = vmatprep.subr.mxu0 0.0
      %890 = vmatpush1.msra.mxu0 0.0
      %891 = vmatprep.subr.mxu0 0.0
      %892 = vmatpush1.msra.mxu0 0.0
      %893 = vmatprep.subr.mxu0 0.0
      %894 = vmatpush1.msra.mxu0 0.0
      %895 = vmatprep.subr.mxu0 0.0
      %896 = vmatpush1.msra.mxu0 0.0
      %897 = vmatprep.subr.mxu0 0.0
      %898 = vmatpush1.msra.mxu0 0.0
      %899 = vmatprep.subr.mxu0 0.0
      %900 = vmatpush1.msra.mxu0 0.0
      %901 = vmatprep.subr.mxu0 0.0
      %902 = vmatpush1.msra.mxu0 0.0
      %903 = vmatprep.subr.mxu0 0.0
      %904 = vmatpush1.msra.mxu0 0.0
      %905 = vmatprep.subr.mxu0 0.0
      %906 = vmatpush1.msra.mxu0 0.0
      %907 = vmatprep.subr.mxu0 0.0
      %908 = vmatpush1.msra.mxu0 0.0
      %909 = vmatprep.subr.mxu0 0.0
      %910 = vmatpush1.msra.mxu0 0.0
      %911 = vmatprep.subr.mxu0 0.0
      %912 = vmatpush1.msra.mxu0 0.0
      %913 = vmatprep.subr.mxu0 0.0
      %914 = vmatpush1.msra.mxu0 0.0
      %915 = vmatprep.subr.mxu0 0.0
      %916 = vmatpush1.msra.mxu0 0.0
      %917 = vmatprep.subr.mxu0 0.0
      %918 = vmatpush1.msra.mxu0 0.0
      %919 = vmatprep.subr.mxu0 0.0
      %920 = vmatpush1.msra.mxu0 0.0
      %921 = vmatprep.subr.mxu0 0.0
      %922 = vmatpush1.msra.mxu0 0.0
      %923 = vmatprep.subr.mxu0 0.0
      %924 = vmatpush1.msra.mxu0 0.0
      %925 = vmatprep.subr.mxu0 0.0
      %926 = vmatpush1.msra.mxu0 0.0
      %927 = vmatprep.subr.mxu0 0.0
      %928 = vmatpush1.msra.mxu0 0.0
      %929 = vmatprep.subr.mxu0 0.0
      %930 = vmatpush1.msra.mxu0 0.0
      %931 = vmatprep.subr.mxu0 0.0
      %932 = vmatpush1.msra.mxu0 0.0
      %933 = vmatprep.mubr.f32.mxu0 0.0
      %934 = vmatmul.mubr.f32.gmra.mrb[0].mxu0 %v867
      %v935 = vpop.f32.mrb[0].mxu0
      %v936 = vadd.f32 0.0, %v935
      %v937 = vpop.f32.mrb[0].mxu0
      %938 = vdwg.mxu0
      %v940 = vsel %vm572, %v387, 0
      %942 = vmatprep.subr.mxu0 0.0
      %943 = vmatpush1.msra.mxu0 %v862
      %944 = vmatprep.subr.mxu0 0.0
      %945 = vmatpush1.msra.mxu0 %v863
      %946 = vmatprep.subr.mxu0 0.0
      %947 = vmatpush1.msra.mxu0 0.0
      %948 = vmatprep.subr.mxu0 0.0
      %949 = vmatpush1.msra.mxu0 0.0
      %950 = vmatprep.subr.mxu0 0.0
      %951 = vmatpush1.msra.mxu0 0.0
      %952 = vmatprep.subr.mxu0 0.0
      %953 = vmatpush1.msra.mxu0 0.0
      %954 = vmatprep.subr.mxu0 0.0
      %955 = vmatpush1.msra.mxu0 0.0
      %956 = vmatprep.subr.mxu0 0.0
      %957 = vmatpush1.msra.mxu0 0.0
      %958 = vmatprep.subr.mxu0 0.0
      %959 = vmatpush1.msra.mxu0 0.0
      %960 = vmatprep.subr.mxu0 0.0
      %961 = vmatpush1.msra.mxu0 0.0
      %962 = vmatprep.subr.mxu0 0.0
      %963 = vmatpush1.msra.mxu0 0.0
      %964 = vmatprep.subr.mxu0 0.0
      %965 = vmatpush1.msra.mxu0 0.0
      %966 = vmatprep.subr.mxu0 0.0
      %967 = vmatpush1.msra.mxu0 0.0
      %968 = vmatprep.subr.mxu0 0.0
      %969 = vmatpush1.msra.mxu0 0.0
      %970 = vmatprep.subr.mxu0 0.0
      %971 = vmatpush1.msra.mxu0 0.0
      %972 = vmatprep.subr.mxu0 0.0
      %973 = vmatpush1.msra.mxu0 0.0
      %974 = vmatprep.subr.mxu0 0.0
      %975 = vmatpush1.msra.mxu0 0.0
      %976 = vmatprep.subr.mxu0 0.0
      %977 = vmatpush1.msra.mxu0 0.0
      %978 = vmatprep.subr.mxu0 0.0
      %979 = vmatpush1.msra.mxu0 0.0
      %980 = vmatprep.subr.mxu0 0.0
      %981 = vmatpush1.msra.mxu0 0.0
      %982 = vmatprep.subr.mxu0 0.0
      %983 = vmatpush1.msra.mxu0 0.0
      %984 = vmatprep.subr.mxu0 0.0
      %985 = vmatpush1.msra.mxu0 0.0
      %986 = vmatprep.subr.mxu0 0.0
      %987 = vmatpush1.msra.mxu0 0.0
      %988 = vmatprep.subr.mxu0 0.0
      %989 = vmatpush1.msra.mxu0 0.0
      %990 = vmatprep.subr.mxu0 0.0
      %991 = vmatpush1.msra.mxu0 0.0
      %992 = vmatprep.subr.mxu0 0.0
      %993 = vmatpush1.msra.mxu0 0.0
      %994 = vmatprep.subr.mxu0 0.0
      %995 = vmatpush1.msra.mxu0 0.0
      %996 = vmatprep.subr.mxu0 0.0
      %997 = vmatpush1.msra.mxu0 0.0
      %998 = vmatprep.subr.mxu0 0.0
      %999 = vmatpush1.msra.mxu0 0.0
      %1000 = vmatprep.subr.mxu0 0.0
      %1001 = vmatpush1.msra.mxu0 0.0
      %1002 = vmatprep.subr.mxu0 0.0
      %1003 = vmatpush1.msra.mxu0 0.0
      %1004 = vmatprep.subr.mxu0 0.0
      %1005 = vmatpush1.msra.mxu0 0.0
      %1006 = vmatprep.mubr.f32.mxu0 0.0
      %1007 = vmatmul.mubr.f32.gmra.mrb[0].mxu0 %v940
      %v1008 = vpop.f32.mrb[0].mxu0
      %v1009 = vadd.f32 %v936, %v1008
      %v1010 = vpop.f32.mrb[0].mxu0
      %1011 = vdwg.mxu0
      %v1012 = vld [vmem:[%s3 + $0x20] sm:$0xff]
      %v1013 = vld [vmem:[%s3 + $0x28] sm:$0xff]
      %v1015 = vsel %vm572, %v861, 0
      %1017 = vmatprep.subr.mxu0 0.0
      %1018 = vmatpush1.msra.mxu0 %v1012
      %1019 = vmatprep.subr.mxu0 0.0
      %1020 = vmatpush1.msra.mxu0 %v1013
      %1021 = vmatprep.subr.mxu0 0.0
      %1022 = vmatpush1.msra.mxu0 0.0
      %1023 = vmatprep.subr.mxu0 0.0
      %1024 = vmatpush1.msra.mxu0 0.0
      %1025 = vmatprep.subr.mxu0 0.0
      %1026 = vmatpush1.msra.mxu0 0.0
      %1027 = vmatprep.subr.mxu0 0.0
      %1028 = vmatpush1.msra.mxu0 0.0
      %1029 = vmatprep.subr.mxu0 0.0
      %1030 = vmatpush1.msra.mxu0 0.0
      %1031 = vmatprep.subr.mxu0 0.0
      %1032 = vmatpush1.msra.mxu0 0.0
      %1033 = vmatprep.subr.mxu0 0.0
      %1034 = vmatpush1.msra.mxu0 0.0
      %1035 = vmatprep.subr.mxu0 0.0
      %1036 = vmatpush1.msra.mxu0 0.0
      %1037 = vmatprep.subr.mxu0 0.0
      %1038 = vmatpush1.msra.mxu0 0.0
      %1039 = vmatprep.subr.mxu0 0.0
      %1040 = vmatpush1.msra.mxu0 0.0
      %1041 = vmatprep.subr.mxu0 0.0
      %1042 = vmatpush1.msra.mxu0 0.0
      %1043 = vmatprep.subr.mxu0 0.0
      %1044 = vmatpush1.msra.mxu0 0.0
      %1045 = vmatprep.subr.mxu0 0.0
      %1046 = vmatpush1.msra.mxu0 0.0
      %1047 = vmatprep.subr.mxu0 0.0
      %1048 = vmatpush1.msra.mxu0 0.0
      %1049 = vmatprep.subr.mxu0 0.0
      %1050 = vmatpush1.msra.mxu0 0.0
      %1051 = vmatprep.subr.mxu0 0.0
      %1052 = vmatpush1.msra.mxu0 0.0
      %1053 = vmatprep.subr.mxu0 0.0
      %1054 = vmatpush1.msra.mxu0 0.0
      %1055 = vmatprep.subr.mxu0 0.0
      %1056 = vmatpush1.msra.mxu0 0.0
      %1057 = vmatprep.subr.mxu0 0.0
      %1058 = vmatpush1.msra.mxu0 0.0
      %1059 = vmatprep.subr.mxu0 0.0
      %1060 = vmatpush1.msra.mxu0 0.0
      %1061 = vmatprep.subr.mxu0 0.0
      %1062 = vmatpush1.msra.mxu0 0.0
      %1063 = vmatprep.subr.mxu0 0.0
      %1064 = vmatpush1.msra.mxu0 0.0
      %1065 = vmatprep.subr.mxu0 0.0
      %1066 = vmatpush1.msra.mxu0 0.0
      %1067 = vmatprep.subr.mxu0 0.0
      %1068 = vmatpush1.msra.mxu0 0.0
      %1069 = vmatprep.subr.mxu0 0.0
      %1070 = vmatpush1.msra.mxu0 0.0
      %1071 = vmatprep.subr.mxu0 0.0
      %1072 = vmatpush1.msra.mxu0 0.0
      %1073 = vmatprep.subr.mxu0 0.0
      %1074 = vmatpush1.msra.mxu0 0.0
      %1075 = vmatprep.subr.mxu0 0.0
      %1076 = vmatpush1.msra.mxu0 0.0
      %1077 = vmatprep.subr.mxu0 0.0
      %1078 = vmatpush1.msra.mxu0 0.0
      %1079 = vmatprep.subr.mxu0 0.0
      %1080 = vmatpush1.msra.mxu0 0.0
      %1081 = vmatprep.mubr.f32.mxu0 0.0
      %1082 = vmatmul.mubr.f32.gmra.mrb[0].mxu0 %v1015
      %v1083 = vpop.f32.mrb[0].mxu0
      %v1084 = vadd.f32 0.0, %v1083
      %v1085 = vpop.f32.mrb[0].mxu0
      %1086 = vdwg.mxu0
      %v1087 = vadd.f32 %v1009, %v1084
      %v1088 = vld [vmem:[%s6 + $0xa] sm:$0x1]
      %v1089 = vlaneseq
      %v1090 = vshrl.u32 %v1089, 7
      %v1091 = vsub.s32 0, %v1090
      %v1092 = vrot.slane %v1088, %v1091
      %v1093 = vadd.f32 %v1087, %v1092
      %vm1094 = vcmp.ge.f32.partialorder %v1093, 0.0
      %v1095 = vmul.f32 %v1093, 0.01
      %v1096 = vsel %vm1094, %v1093, %v1095
      %v1097 = vld [vmem:[%s4] sm:$0xff]
      %v1098 = vld [vmem:[%s4 + $0x8] sm:$0xff]
      %v1099 = vld [vmem:[%s4 + $0x10] sm:$0xff]
      %v1100 = vld [vmem:[%s4 + $0x18] sm:$0xff]
      %v1101 = vld [vmem:[%s6 + $0xb] sm:$0x1]
      %v1102 = vlaneseq
      %v1103 = vshrl.u32 %v1102, 7
      %v1104 = vsub.s32 0, %v1103
      %v1105 = vrot.slane %v1101, %v1104
      %v1107 = vsel %vm313, %v1096, 0
      %1109 = vmatprep.subr.mxu0 0.0
      %1110 = vmatpush1.msra.mxu0 %v1097
      %1111 = vmatprep.subr.mxu0 0.0
      %1112 = vmatpush1.msra.mxu0 %v1098
      %1113 = vmatprep.subr.mxu0 0.0
      %1114 = vmatpush1.msra.mxu0 %v1099
      %1115 = vmatprep.subr.mxu0 0.0
      %1116 = vmatpush1.msra.mxu0 %v1100
      %1117 = vmatprep.subr.mxu0 0.0
      %1118 = vmatpush1.msra.mxu0 0.0
      %1119 = vmatprep.subr.mxu0 0.0
      %1120 = vmatpush1.msra.mxu0 0.0
      %1121 = vmatprep.subr.mxu0 0.0
      %1122 = vmatpush1.msra.mxu0 0.0
      %1123 = vmatprep.subr.mxu0 0.0
      %1124 = vmatpush1.msra.mxu0 0.0
      %1125 = vmatprep.subr.mxu0 0.0
      %1126 = vmatpush1.msra.mxu0 0.0
      %1127 = vmatprep.subr.mxu0 0.0
      %1128 = vmatpush1.msra.mxu0 0.0
      %1129 = vmatprep.subr.mxu0 0.0
      %1130 = vmatpush1.msra.mxu0 0.0
      %1131 = vmatprep.subr.mxu0 0.0
      %1132 = vmatpush1.msra.mxu0 0.0
      %1133 = vmatprep.subr.mxu0 0.0
      %1134 = vmatpush1.msra.mxu0 0.0
      %1135 = vmatprep.subr.mxu0 0.0
      %1136 = vmatpush1.msra.mxu0 0.0
      %1137 = vmatprep.subr.mxu0 0.0
      %1138 = vmatpush1.msra.mxu0 0.0
      %1139 = vmatprep.subr.mxu0 0.0
      %1140 = vmatpush1.msra.mxu0 0.0
      %1141 = vmatprep.subr.mxu0 0.0
      %1142 = vmatpush1.msra.mxu0 0.0
      %1143 = vmatprep.subr.mxu0 0.0
      %1144 = vmatpush1.msra.mxu0 0.0
      %1145 = vmatprep.subr.mxu0 0.0
      %1146 = vmatpush1.msra.mxu0 0.0
      %1147 = vmatprep.subr.mxu0 0.0
      %1148 = vmatpush1.msra.mxu0 0.0
      %1149 = vmatprep.subr.mxu0 0.0
      %1150 = vmatpush1.msra.mxu0 0.0
      %1151 = vmatprep.subr.mxu0 0.0
      %1152 = vmatpush1.msra.mxu0 0.0
      %1153 = vmatprep.subr.mxu0 0.0
      %1154 = vmatpush1.msra.mxu0 0.0
      %1155 = vmatprep.subr.mxu0 0.0
      %1156 = vmatpush1.msra.mxu0 0.0
      %1157 = vmatprep.subr.mxu0 0.0
      %1158 = vmatpush1.msra.mxu0 0.0
      %1159 = vmatprep.subr.mxu0 0.0
      %1160 = vmatpush1.msra.mxu0 0.0
      %1161 = vmatprep.subr.mxu0 0.0
      %1162 = vmatpush1.msra.mxu0 0.0
      %1163 = vmatprep.subr.mxu0 0.0
      %1164 = vmatpush1.msra.mxu0 0.0
      %1165 = vmatprep.subr.mxu0 0.0
      %1166 = vmatpush1.msra.mxu0 0.0
      %1167 = vmatprep.subr.mxu0 0.0
      %1168 = vmatpush1.msra.mxu0 0.0
      %1169 = vmatprep.subr.mxu0 0.0
      %1170 = vmatpush1.msra.mxu0 0.0
      %1171 = vmatprep.subr.mxu0 0.0
      %1172 = vmatpush1.msra.mxu0 0.0
      %1173 = vmatprep.mubr.f32.mxu0 0.0
      %1174 = vmatmul.mubr.f32.gmra.mrb[0].mxu0 %v1107
      %v1175 = vpop.f32.mrb[0].mxu0
      %v1176 = vadd.f32 %v1105, %v1175
      %v1177 = vpop.f32.mrb[0].mxu0
      %1178 = vdwg.mxu0
      %vm1179 = vcmp.ge.f32.partialorder %v1176, 0.0
      %v1180 = vmul.f32 %v1176, 0.01
      %v1181 = vsel %vm1179, %v1176, %v1180
      %v1182 = vld [vmem:[%s5] sm:$0xff]
      %v1183 = vld [vmem:[%s5 + $0x8] sm:$0xff]
      %v1184 = vld [vmem:[%s5 + $0x10] sm:$0xff]
      %v1185 = vld [vmem:[%s5 + $0x18] sm:$0xff]
      %v1186 = vld [vmem:[%s6 + $0xc] sm:$0x1]
      %v1187 = vlaneseq
      %v1188 = vshrl.u32 %v1187, 7
      %v1189 = vsub.s32 0, %v1188
      %v1190 = vrot.slane %v1186, %v1189
      %v1192 = vsel %vm313, %v1181, 0
      %1194 = vmatprep.subr.mxu0 0.0
      %1195 = vmatpush1.msra.mxu0 %v1182
      %1196 = vmatprep.subr.mxu0 0.0
      %1197 = vmatpush1.msra.mxu0 %v1183
      %1198 = vmatprep.subr.mxu0 0.0
      %1199 = vmatpush1.msra.mxu0 %v1184
      %1200 = vmatprep.subr.mxu0 0.0
      %1201 = vmatpush1.msra.mxu0 %v1185
      %1202 = vmatprep.subr.mxu0 0.0
      %1203 = vmatpush1.msra.mxu0 0.0
      %1204 = vmatprep.subr.mxu0 0.0
      %1205 = vmatpush1.msra.mxu0 0.0
      %1206 = vmatprep.subr.mxu0 0.0
      %1207 = vmatpush1.msra.mxu0 0.0
      %1208 = vmatprep.subr.mxu0 0.0
      %1209 = vmatpush1.msra.mxu0 0.0
      %1210 = vmatprep.subr.mxu0 0.0
      %1211 = vmatpush1.msra.mxu0 0.0
      %1212 = vmatprep.subr.mxu0 0.0
      %1213 = vmatpush1.msra.mxu0 0.0
      %1214 = vmatprep.subr.mxu0 0.0
      %1215 = vmatpush1.msra.mxu0 0.0
      %1216 = vmatprep.subr.mxu0 0.0
      %1217 = vmatpush1.msra.mxu0 0.0
      %1218 = vmatprep.subr.mxu0 0.0
      %1219 = vmatpush1.msra.mxu0 0.0
      %1220 = vmatprep.subr.mxu0 0.0
      %1221 = vmatpush1.msra.mxu0 0.0
      %1222 = vmatprep.subr.mxu0 0.0
      %1223 = vmatpush1.msra.mxu0 0.0
      %1224 = vmatprep.subr.mxu0 0.0
      %1225 = vmatpush1.msra.mxu0 0.0
      %1226 = vmatprep.subr.mxu0 0.0
      %1227 = vmatpush1.msra.mxu0 0.0
      %1228 = vmatprep.subr.mxu0 0.0
      %1229 = vmatpush1.msra.mxu0 0.0
      %1230 = vmatprep.subr.mxu0 0.0
      %1231 = vmatpush1.msra.mxu0 0.0
      %1232 = vmatprep.subr.mxu0 0.0
      %1233 = vmatpush1.msra.mxu0 0.0
      %1234 = vmatprep.subr.mxu0 0.0
      %1235 = vmatpush1.msra.mxu0 0.0
      %1236 = vmatprep.subr.mxu0 0.0
      %1237 = vmatpush1.msra.mxu0 0.0
      %1238 = vmatprep.subr.mxu0 0.0
      %1239 = vmatpush1.msra.mxu0 0.0
      %1240 = vmatprep.subr.mxu0 0.0
      %1241 = vmatpush1.msra.mxu0 0.0
      %1242 = vmatprep.subr.mxu0 0.0
      %1243 = vmatpush1.msra.mxu0 0.0
      %1244 = vmatprep.subr.mxu0 0.0
      %1245 = vmatpush1.msra.mxu0 0.0
      %1246 = vmatprep.subr.mxu0 0.0
      %1247 = vmatpush1.msra.mxu0 0.0
      %1248 = vmatprep.subr.mxu0 0.0
      %1249 = vmatpush1.msra.mxu0 0.0
      %1250 = vmatprep.subr.mxu0 0.0
      %1251 = vmatpush1.msra.mxu0 0.0
      %1252 = vmatprep.subr.mxu0 0.0
      %1253 = vmatpush1.msra.mxu0 0.0
      %1254 = vmatprep.subr.mxu0 0.0
      %1255 = vmatpush1.msra.mxu0 0.0
      %1256 = vmatprep.subr.mxu0 0.0
      %1257 = vmatpush1.msra.mxu0 0.0
      %1258 = vmatprep.mubr.f32.mxu0 0.0
      %1259 = vmatmul.mubr.f32.gmra.mrb[0].mxu0 %v1192
      %v1260 = vpop.f32.mrb[0].mxu0
      %v1261 = vadd.f32 %v1190, %v1260
      %v1262 = vpop.f32.mrb[0].mxu0
      %1263 = vdwg.mxu0
      %v1264 = vlaneseq
      %v1265 = vand.u32 %v1264, 127
      %vm1266 = vcmp.eq.s32.totalorder %v1265, 0
      %v1267 = vtanh.pop %v1261
      %v1268 = vxor.u32 %v1261, 2147483648
      %v1269 = vmul.f32 %v1268, 1.442695
      %v1270 = vpow.pop %v1269
      %v1271 = vadd.f32 %v1270, 1.0
      %v1272 = vrcp.pop %v1271
      %v1273 = vmul.f32 1.0, %v1272
      %v1274 = vsel %vm1266, %v1267, %v1273
      %vm1275 = vcmask 15360
      %1276 = vst.msk [vmem:[%s273] sm:$0xff] %vm1275, %v1274
      %p1277 = scmp.lt.s32.totalorder %s18, 1
      %s1278 = scalar_select %p1277, %s18, 1
      %s1279 = smul.addr %s1278, 8
      %s1280 = scalar_lea.vmem %s7, %s1279
      // Predicated region
      $region49: #{tpu_custom_call.1} parent=47 // pred_check
        %p1281 = pneg %p188
      $region50: #{tpu_custom_call.1} parent=47 // pred_check_branch
        %1283 = sbr.rel (%p1281) target = $region52
      $region51: #{tpu_custom_call.1} parent=47 // pred_region
        _
      $region52: #{tpu_custom_call.1} parent=47 // pred_fallthru
        _
    $region48: #{tpu_custom_call.1} parent=5 // pred_fallthru
      _
    %p1284 = scmp.le.s32.totalorder 2, %s13
    // Predicated region
    $region53: #{tpu_custom_call.1} parent=5 // pred_check
      %p1285 = pneg %p1284
    $region54: #{tpu_custom_call.1} parent=5 // pred_check_branch
      %1287 = sbr.rel (%p1285) target = $region56
    $region55: #{tpu_custom_call.1} parent=5 // pred_region
      %s1288 = ssub.s32 %s13, 2
      // Predicated region
      $region57: #{tpu_custom_call.1} parent=55 // pred_check
        %p1289 = pneg %p194
      $region58: #{tpu_custom_call.1} parent=55 // pred_check_branch
        %1291 = sbr.rel (%p1289) target = $region60
      $region59: #{tpu_custom_call.1} parent=55 // pred_region
        %p1292 = scmp.lt.s32.totalorder %s19, 1
        %s1293 = scalar_select %p1292, %s19, 1
        %s1294 = smul.addr %s1293, 8
        %s1295 = scalar_lea.vmem %s7, %s1294
      $region60: #{tpu_custom_call.1} parent=55 // pred_fallthru
        _
    $region56: #{tpu_custom_call.1} parent=5 // pred_fallthru
      _
  $region6: #{tpu_custom_call.1} parent=0 // loop_footer
    %s17 = sadd.s32 1, %s13
  $region7: #{tpu_custom_call.1} parent=0 // loop_footer_branch
    %12 = sbr.rel target = $region3
  $region8: #{tpu_custom_call.1} parent=0 // loop_exit
    _

</llo_original>
